<compile_context>
chip_gen: v6e
topology: v6e:2x2x1
jax: 0.10.0
libtpu: 0.0.40
codegen_flags: <defaults>
</compile_context>

<pallas_src>
import functools

import jax
import jax.numpy as jnp
import jax.scipy.linalg as jsl
from jax.experimental import pallas as pl
from jax.experimental.pallas import tpu as pltpu

ALPHA = 1e-6
_LANE = 128
_SUBLANE = 8


def _round_up(n, m):
    return ((n + m - 1) // m) * m


def _encoder_kernel(T, slab_pad, x_ref, w1_ref, b1_ref, w2_ref, b2_ref,
                    w3_ref, b3_ref, slab_ref):
    """One batch tile: fused 3-layer MLP -> [mu | Sigma_flat | pad] slab."""
    TT = T * T
    x = x_ref[...]                       # (Bb, in_dim), f32 or bf16
    W1 = w1_ref[...]
    W2 = w2_ref[...]
    W3 = w3_ref[...]
    wdt = W1.dtype                       # f32 (default) or bf16

    # Fused MLP chain (mean ++ diag ++ full ++ full^T heads), f32 accumulation.
    h = jnp.dot(x.astype(wdt), W1, preferred_element_type=jnp.float32) + b1_ref[...]
    h = jnp.maximum(h, 0.0)
    h = jnp.dot(h.astype(wdt), W2, preferred_element_type=jnp.float32) + b2_ref[...]
    h = jnp.maximum(h, 0.0)
    out = jnp.dot(h.astype(wdt), W3, preferred_element_type=jnp.float32) + b3_ref[...]
    # out: (Bb, OUTp) = [mu(T) | diag-logits(T) | M_flat(TT) | M^T_flat(TT) | pad]

    Bb = out.shape[0]
    mu = out[:, :T]                                            # (Bb, T)
    dexp = jnp.exp(out[:, T:2 * T])                            # (Bb, T), f32 epilogue
    m3 = out[:, 2 * T:2 * T + TT].reshape(Bb, T, T)            # M[b, i, j]
    mt3 = out[:, 2 * T + TT:2 * T + 2 * TT].reshape(Bb, T, T)  # M[b, j, i] (permuted head)

    row = jax.lax.broadcasted_iota(jnp.int32, (T, T), 0)
    col = jax.lax.broadcasted_iota(jnp.int32, (T, T), 1)
    diag = (row == col)[None, :, :]
    stril = (row > col)[None, :, :]
    striu = (row < col)[None, :, :]

    d3 = dexp[:, :, None]                                      # (Bb, T, 1)
    # L  = tril(diag_embed(exp(d)) + M-with-zeroed-diag)
    L3 = jnp.where(diag, d3, jnp.where(stril, m3, 0.0))        # (Bb, T, T)
    # L^T built directly from the transposed head -> no in-kernel transpose.
    R3 = jnp.where(diag, d3, jnp.where(striu, mt3, 0.0))       # (Bb, T, T)

    # C = L @ L^T + ALPHA*I as T unrolled column outer-product FMAs (VPU only,
    # no batched tiny matmuls on the MXU).
    c3 = jnp.broadcast_to(jnp.where(diag, jnp.float32(ALPHA), jnp.float32(0.0)),
                          (Bb, T, T))
    for j in range(T):
        c3 = c3 + L3[:, :, j:j + 1] * R3[:, j:j + 1, :]

    sigma_flat = c3.reshape(Bb, TT)

    # One lane-dense 128-wide store per row block: [mu | Sigma_flat | zero pad].
    parts = [mu, sigma_flat]
    if slab_pad:
        parts.append(jnp.zeros((Bb, slab_pad), jnp.float32))
    slab_ref[...] = jnp.concatenate(parts, axis=-1)


def _init_linear(key, fan_in, fan_out):
    """PyTorch nn.Linear default init: U(-1/sqrt(fan_in), 1/sqrt(fan_in)).
    Weight in (in, out) layout so the kernel does x @ W + b."""
    kw, kb = jax.random.split(key)
    bound = 1.0 / jnp.sqrt(jnp.float32(fan_in))
    W = jax.random.uniform(kw, (fan_in, fan_out), jnp.float32, -bound, bound)
    b = jax.random.uniform(kb, (1, fan_out), jnp.float32, -bound, bound)
    return W, b


def make_encoder_params(key, sequence_length, x_dimension, inter_dim):
    """Three 3-layer MLPs: mean (->T), diagonal (->T), full-matrix (->T*T)."""
    in_dim = sequence_length * x_dimension
    keys = jax.random.split(key, 9)
    params = []
    # mean MLP
    params += list(_init_linear(keys[0], in_dim, inter_dim))
    params += list(_init_linear(keys[1], inter_dim, inter_dim))
    params += list(_init_linear(keys[2], inter_dim, sequence_length))
    # diagonal MLP
    params += list(_init_linear(keys[3], in_dim, inter_dim))
    params += list(_init_linear(keys[4], inter_dim, inter_dim))
    params += list(_init_linear(keys[5], inter_dim, sequence_length))
    # full-matrix MLP
    params += list(_init_linear(keys[6], in_dim, inter_dim))
    params += list(_init_linear(keys[7], inter_dim, inter_dim))
    params += list(_init_linear(keys[8], inter_dim, sequence_length * sequence_length))
    return params


def _fuse_params(params, T):
    """Fuse the 3 MLPs into one chain; duplicate the full-matrix head with
    column-permuted weights so the kernel also receives M^T flat."""
    (mW1, mb1, mW2, mb2, mW3, mb3,
     dW1, db1, dW2, db2, dW3, db3,
     fW1, fb1, fW2, fb2, fW3, fb3) = params
    TT = T * T
    # new column j*T+i of the duplicated head <- original column i*T+j
    perm = jnp.arange(TT).reshape(T, T).T.reshape(-1)
    fW3d = jnp.concatenate([fW3, fW3[:, perm]], axis=1)        # (inter, 2*TT)
    fb3d = jnp.concatenate([fb3, fb3[:, perm]], axis=1)        # (1, 2*TT)

    W1 = jnp.concatenate([mW1, dW1, fW1], axis=1)              # (in, 3I)  shared input
    b1 = jnp.concatenate([mb1, db1, fb1], axis=1)              # (1, 3I)
    W2 = jsl.block_diag(mW2, dW2, fW2)                         # (3I, 3I)
    b2 = jnp.concatenate([mb2, db2, fb2], axis=1)              # (1, 3I)
    W3 = jsl.block_diag(mW3, dW3, fW3d)                        # (3I, 2T + 2*TT)
    b3 = jnp.concatenate([mb3, db3, fb3d], axis=1)             # (1, 2T + 2*TT)
    return W1, b1, W2, b2, W3, b3


@functools.partial(jax.jit,
                   static_argnames=("sequence_length", "batch_tile",
                                    "use_bf16_matmul"))
def encoder_forward(x, params, *, sequence_length, batch_tile=256,
                    use_bf16_matmul=False):
    """x: (B, T, x_dim) float32 -> (mu (B, T), Sigma (B, T, T))."""
    B, T, xd = x.shape
    assert T == sequence_length
    in_dim = T * xd
    TT = T * T

    W1, b1, W2, b2, W3, b3 = _fuse_params(params, T)
    H = W1.shape[1]                      # 3 * inter_dim
    OUT = W3.shape[1]                    # 2*T + 2*T*T

    # Only the resident weight head dims are lane-padded (exact zero-padding);
    # x keeps its true K so the main HBM stream stays compact.
    Hp = _round_up(H, _LANE)
    OUTp = _round_up(OUT, _LANE)
    SLAB = _round_up(T + TT, _LANE)      # fused [mu | Sigma_flat | pad] output
    slab_pad = SLAB - (T + TT)

    # Batch tiling: single-step fast path for small batches; even #steps
    # otherwise so both v7x TensorCores get work.
    Bb_cap = max(_SUBLANE, _round_up(batch_tile, _SUBLANE))
    if B <= Bb_cap:
        Bb = _round_up(B, _SUBLANE)
        steps = 1
    else:
        Bb = Bb_cap
        steps = -(-B // Bb)
        if steps % 2:
            steps += 1
    Bp = steps * Bb

    x_dtype = jnp.bfloat16 if use_bf16_matmul else jnp.float32
    x_flat = x.reshape(B, in_dim).astype(x_dtype)
    if Bp != B:
        x_flat = jnp.pad(x_flat, ((0, Bp - B), (0, 0)))

    def pad2(a, r, c):
        return jnp.pad(a, ((0, r - a.shape[0]), (0, c - a.shape[1])))

    w_dtype = jnp.bfloat16 if use_bf16_matmul else jnp.float32
    W1p = pad2(W1, in_dim, Hp).astype(w_dtype)
    W2p = pad2(W2, Hp, Hp).astype(w_dtype)
    W3p = pad2(W3, Hp, OUTp).astype(w_dtype)
    b1p = pad2(b1, 1, Hp)
    b2p = pad2(b2, 1, Hp)
    b3p = pad2(b3, 1, OUTp)

    # VMEM budget tracks the chosen tiles (double-buffered streams + resident
    # weights + epilogue intermediates) with generous margin; v7x-safe (<64MiB).
    bpe = 2 if use_bf16_matmul else 4
    weight_bytes = bpe * (in_dim * Hp + Hp * Hp + Hp * OUTp) + 4 * (2 * Hp + OUTp)
    tile_bytes = bpe * Bb * in_dim + 4 * Bb * SLAB
    interm_bytes = 4 * Bb * (2 * Hp + OUTp + 8 * TT)
    vmem_limit = int(min(48 << 20,
                         2 * tile_bytes + 2 * weight_bytes + interm_bytes + (8 << 20)))

    flops = 2 * Bp * (in_dim * Hp + Hp * Hp + Hp * OUTp) + 2 * Bp * T * TT
    bytes_accessed = bpe * Bp * in_dim + weight_bytes + 4 * Bp * SLAB

    kernel = functools.partial(_encoder_kernel, T, slab_pad)

    slab = pl.pallas_call(
        kernel,
        out_shape=jax.ShapeDtypeStruct((Bp, SLAB), jnp.float32),
        grid_spec=pltpu.PrefetchScalarGridSpec(
            num_scalar_prefetch=0,
            grid=(steps,),
            in_specs=[
                pl.BlockSpec((Bb, in_dim), lambda b: (b, 0)),   # x: streamed, unpadded K
                pl.BlockSpec((in_dim, Hp), lambda b: (0, 0)),   # weights: VMEM-resident
                pl.BlockSpec((1, Hp), lambda b: (0, 0)),
                pl.BlockSpec((Hp, Hp), lambda b: (0, 0)),
                pl.BlockSpec((1, Hp), lambda b: (0, 0)),
                pl.BlockSpec((Hp, OUTp), lambda b: (0, 0)),
                pl.BlockSpec((1, OUTp), lambda b: (0, 0)),
            ],
            out_specs=pl.BlockSpec((Bb, SLAB), lambda b: (b, 0)),
        ),
        compiler_params=pltpu.CompilerParams(
            dimension_semantics=("parallel",),   # megacore batch sharding on v7x
            vmem_limit_bytes=vmem_limit,
        ),
        cost_estimate=pl.CostEstimate(
            flops=int(flops),
            transcendentals=int(Bp * T),
            bytes_accessed=int(bytes_accessed),
        ),
    )(x_flat, W1p, b1p, W2p, b2p, W3p, b3p)

    mu = slab[:B, :T]
    sigma = slab[:B, T:T + TT].reshape(B, T, T)
    return mu, sigma


def _reference_forward(x, params, sequence_length):
    """Pure-JAX reference mirroring the PyTorch module (unfused f32 weights)."""
    B, T, xd = x.shape
    inp = x.reshape(B, T * xd)

    def mlp3(h, p):
        W1, b1, W2, b2, W3, b3 = p
        h = jnp.maximum(h @ W1 + b1, 0.0)
        h = jnp.maximum(h @ W2 + b2, 0.0)
        return h @ W3 + b3

    mean_p, diag_p, full_p = params[0:6], params[6:12], params[12:18]
    mu = mlp3(inp, mean_p)
    D = jnp.exp(mlp3(inp, diag_p))
    M = mlp3(inp, full_p).reshape(B, T, T)
    idx = jnp.arange(T)
    M = M.at[:, idx, idx].set(0.0)
    L = jnp.tril(jax.vmap(jnp.diag)(D) + M)
    C = jnp.einsum('bij,bkj->bik', L, L) + ALPHA * jnp.eye(T)[None]
    return mu, C


if __name__ == "__main__":
    B, T, XD, INTER = 16, 8, 4, 32        # small shapes; single-step fast path

    key = jax.random.PRNGKey(0)
    k_x, k_p = jax.random.split(key)
    x = jax.random.normal(k_x, (B, T, XD), jnp.float32)
    params = make_encoder_params(k_p, T, XD, INTER)

    # Default f32 path (exact parity with the f32 PyTorch module).
    mu, sigma = encoder_forward(x, params, sequence_length=T)
    jax.block_until_ready((mu, sigma))

    mu_ref, sigma_ref = _reference_forward(x, params, T)
    assert mu.shape == (B, T) and sigma.shape == (B, T, T)
    assert jnp.allclose(mu, mu_ref, atol=1e-3, rtol=1e-3)
    assert jnp.allclose(sigma, sigma_ref, atol=1e-3, rtol=1e-3)

    # bf16-operand / f32-accumulate MXU path: compile/run smoke test only.
    # TODO(synk): validate the bf16 path against the f32 reference with an
    #             explicit tolerance before enabling it in production.
    mu_bf, sigma_bf = encoder_forward(x, params, sequence_length=T,
                                      use_bf16_matmul=True)
    jax.block_until_ready((mu_bf, sigma_bf))
    assert bool(jnp.isfinite(mu_bf).all()) and bool(jnp.isfinite(sigma_bf).all())

    print("KERNEL_OK")
</pallas_src>

<mosaic_0001>
module attributes {stable_mosaic.version = 11 : i64} {
  func.func @_encoder_kernel(%arg0: i32, %arg1: memref<16x32xf32, #tpu.memory_space<vmem>>, %arg2: memref<32x128xf32, #tpu.memory_space<vmem>>, %arg3: memref<1x128xf32, #tpu.memory_space<vmem>>, %arg4: memref<128x128xf32, #tpu.memory_space<vmem>>, %arg5: memref<1x128xf32, #tpu.memory_space<vmem>>, %arg6: memref<128x256xf32, #tpu.memory_space<vmem>>, %arg7: memref<1x256xf32, #tpu.memory_space<vmem>>, %arg8: memref<16x128xf32, #tpu.memory_space<vmem>>) attributes {dimension_semantics = [#tpu.dimension_semantics<parallel>], iteration_bounds = array<i64: 1>, scalar_prefetch = 0 : i64, scratch_operands = 0 : i64, tpu.core_type = #tpu.core_type<tc>, window_params = [{transform_indices = @transform_0, window_bounds = array<i64: 16, 32>}, {pipeline_mode = #tpu.pipeline_mode<synchronous>, transform_indices = @transform_1, window_bounds = array<i64: 32, 128>}, {pipeline_mode = #tpu.pipeline_mode<synchronous>, transform_indices = @transform_2, window_bounds = array<i64: 1, 128>}, {pipeline_mode = #tpu.pipeline_mode<synchronous>, transform_indices = @transform_3, window_bounds = array<i64: 128, 128>}, {pipeline_mode = #tpu.pipeline_mode<synchronous>, transform_indices = @transform_4, window_bounds = array<i64: 1, 128>}, {pipeline_mode = #tpu.pipeline_mode<synchronous>, transform_indices = @transform_5, window_bounds = array<i64: 128, 256>}, {pipeline_mode = #tpu.pipeline_mode<synchronous>, transform_indices = @transform_6, window_bounds = array<i64: 1, 256>}, {transform_indices = @transform_7, window_bounds = array<i64: 16, 128>}]} {
    %c0 = arith.constant 0 : index
    %c0_0 = arith.constant 0 : index
    %0 = vector.load %arg1[%c0, %c0_0] : memref<16x32xf32, #tpu.memory_space<vmem>>, vector<16x32xf32>
    %c0_1 = arith.constant 0 : index
    %c0_2 = arith.constant 0 : index
    %1 = vector.load %arg2[%c0_1, %c0_2] : memref<32x128xf32, #tpu.memory_space<vmem>>, vector<32x128xf32>
    %c0_3 = arith.constant 0 : index
    %c0_4 = arith.constant 0 : index
    %2 = vector.load %arg4[%c0_3, %c0_4] : memref<128x128xf32, #tpu.memory_space<vmem>>, vector<128x128xf32>
    %c0_5 = arith.constant 0 : index
    %c0_6 = arith.constant 0 : index
    %3 = vector.load %arg6[%c0_5, %c0_6] : memref<128x256xf32, #tpu.memory_space<vmem>>, vector<128x256xf32>
    %cst = arith.constant dense<0.000000e+00> : vector<16x128xf32>
    %4 = tpu.matmul %0, %1, %cst {dimension_numbers = #tpu.dot_dimension_numbers<[1], [0], [0], [1], [0, 0, 1, 1], [], []>} : vector<16x32xf32>, vector<32x128xf32>, vector<16x128xf32> -> vector<16x128xf32>
    %c0_7 = arith.constant 0 : index
    %c0_8 = arith.constant 0 : index
    %5 = vector.load %arg3[%c0_7, %c0_8] : memref<1x128xf32, #tpu.memory_space<vmem>>, vector<1x128xf32>
    %6 = vector.broadcast %5 : vector<1x128xf32> to vector<16x128xf32>
    %7 = arith.addf %4, %6 : vector<16x128xf32>
    %cst_9 = arith.constant 0.000000e+00 : f32
    %8 = vector.broadcast %cst_9 : f32 to vector<16x128xf32>
    %9 = arith.maximumf %7, %8 : vector<16x128xf32>
    %cst_10 = arith.constant dense<0.000000e+00> : vector<16x128xf32>
    %10 = tpu.matmul %9, %2, %cst_10 {dimension_numbers = #tpu.dot_dimension_numbers<[1], [0], [0], [1], [0, 0, 1, 1], [], []>} : vector<16x128xf32>, vector<128x128xf32>, vector<16x128xf32> -> vector<16x128xf32>
    %c0_11 = arith.constant 0 : index
    %c0_12 = arith.constant 0 : index
    %11 = vector.load %arg5[%c0_11, %c0_12] : memref<1x128xf32, #tpu.memory_space<vmem>>, vector<1x128xf32>
    %12 = vector.broadcast %11 : vector<1x128xf32> to vector<16x128xf32>
    %13 = arith.addf %10, %12 : vector<16x128xf32>
    %cst_13 = arith.constant 0.000000e+00 : f32
    %14 = vector.broadcast %cst_13 : f32 to vector<16x128xf32>
    %15 = arith.maximumf %13, %14 : vector<16x128xf32>
    %cst_14 = arith.constant dense<0.000000e+00> : vector<16x256xf32>
    %16 = tpu.matmul %15, %3, %cst_14 {dimension_numbers = #tpu.dot_dimension_numbers<[1], [0], [0], [1], [0, 0, 1, 1], [], []>} : vector<16x128xf32>, vector<128x256xf32>, vector<16x256xf32> -> vector<16x256xf32>
    %c0_15 = arith.constant 0 : index
    %c0_16 = arith.constant 0 : index
    %17 = vector.load %arg7[%c0_15, %c0_16] : memref<1x256xf32, #tpu.memory_space<vmem>>, vector<1x256xf32>
    %18 = vector.broadcast %17 : vector<1x256xf32> to vector<16x256xf32>
    %19 = arith.addf %16, %18 : vector<16x256xf32>
    %20 = vector.extract_strided_slice %19 {offsets = [0, 0], sizes = [16, 8], strides = [1, 1]} : vector<16x256xf32> to vector<16x8xf32>
    %21 = vector.extract_strided_slice %19 {offsets = [0, 8], sizes = [16, 8], strides = [1, 1]} : vector<16x256xf32> to vector<16x8xf32>
    %22 = math.exp %21 : vector<16x8xf32>
    %23 = vector.extract_strided_slice %19 {offsets = [0, 16], sizes = [16, 64], strides = [1, 1]} : vector<16x256xf32> to vector<16x64xf32>
    %24 = vector.shape_cast %23 : vector<16x64xf32> to vector<16x8x8xf32>
    %25 = vector.extract_strided_slice %19 {offsets = [0, 80], sizes = [16, 64], strides = [1, 1]} : vector<16x256xf32> to vector<16x64xf32>
    %26 = vector.shape_cast %25 : vector<16x64xf32> to vector<16x8x8xf32>
    %27 = tpu.iota {dimensions = array<i32: 0>} : vector<8x8xi32>
    %28 = tpu.iota {dimensions = array<i32: 1>} : vector<8x8xi32>
    %29 = arith.cmpi eq, %27, %28 : vector<8x8xi32>
    %30 = vector.shape_cast %29 : vector<8x8xi1> to vector<1x8x8xi1>
    %31 = arith.cmpi sgt, %27, %28 : vector<8x8xi32>
    %32 = vector.shape_cast %31 : vector<8x8xi1> to vector<1x8x8xi1>
    %33 = arith.cmpi slt, %27, %28 : vector<8x8xi32>
    %34 = vector.shape_cast %33 : vector<8x8xi1> to vector<1x8x8xi1>
    %35 = vector.shape_cast %22 : vector<16x8xf32> to vector<16x8x1xf32>
    %cst_17 = arith.constant 0.000000e+00 : f32
    %36 = vector.shape_cast %32 : vector<1x8x8xi1> to vector<1x8x8xi1>
    %37 = vector.broadcast %36 : vector<1x8x8xi1> to vector<16x8x8xi1>
    %38 = vector.broadcast %cst_17 : f32 to vector<16x8x8xf32>
    %39 = arith.select %37, %24, %38 : vector<16x8x8xi1>, vector<16x8x8xf32>
    %40 = vector.shape_cast %30 : vector<1x8x8xi1> to vector<1x8x8xi1>
    %41 = vector.broadcast %40 : vector<1x8x8xi1> to vector<16x8x8xi1>
    %42 = vector.shape_cast %35 : vector<16x8x1xf32> to vector<16x8x1xf32>
    %43 = vector.broadcast %42 : vector<16x8x1xf32> to vector<16x8x8xf32>
    %44 = arith.select %41, %43, %39 : vector<16x8x8xi1>, vector<16x8x8xf32>
    %cst_18 = arith.constant 0.000000e+00 : f32
    %45 = vector.shape_cast %34 : vector<1x8x8xi1> to vector<1x8x8xi1>
    %46 = vector.broadcast %45 : vector<1x8x8xi1> to vector<16x8x8xi1>
    %47 = vector.broadcast %cst_18 : f32 to vector<16x8x8xf32>
    %48 = arith.select %46, %26, %47 : vector<16x8x8xi1>, vector<16x8x8xf32>
    %49 = vector.shape_cast %30 : vector<1x8x8xi1> to vector<1x8x8xi1>
    %50 = vector.broadcast %49 : vector<1x8x8xi1> to vector<16x8x8xi1>
    %51 = vector.shape_cast %35 : vector<16x8x1xf32> to vector<16x8x1xf32>
    %52 = vector.broadcast %51 : vector<16x8x1xf32> to vector<16x8x8xf32>
    %53 = arith.select %50, %52, %48 : vector<16x8x8xi1>, vector<16x8x8xf32>
    %cst_19 = arith.constant 9.99999997E-7 : f32
    %cst_20 = arith.constant 0.000000e+00 : f32
    %54 = vector.broadcast %cst_19 : f32 to vector<1x8x8xf32>
    %55 = vector.broadcast %cst_20 : f32 to vector<1x8x8xf32>
    %56 = arith.select %30, %54, %55 : vector<1x8x8xi1>, vector<1x8x8xf32>
    %57 = vector.shape_cast %56 : vector<1x8x8xf32> to vector<1x8x8xf32>
    %58 = vector.broadcast %57 : vector<1x8x8xf32> to vector<16x8x8xf32>
    %59 = vector.extract_strided_slice %44 {offsets = [0, 0, 0], sizes = [16, 8, 1], strides = [1, 1, 1]} : vector<16x8x8xf32> to vector<16x8x1xf32>
    %60 = vector.extract_strided_slice %53 {offsets = [0, 0, 0], sizes = [16, 1, 8], strides = [1, 1, 1]} : vector<16x8x8xf32> to vector<16x1x8xf32>
    %61 = vector.broadcast %59 : vector<16x8x1xf32> to vector<16x8x8xf32>
    %62 = vector.broadcast %60 : vector<16x1x8xf32> to vector<16x8x8xf32>
    %63 = arith.mulf %61, %62 : vector<16x8x8xf32>
    %64 = arith.addf %58, %63 : vector<16x8x8xf32>
    %65 = vector.extract_strided_slice %44 {offsets = [0, 0, 1], sizes = [16, 8, 1], strides = [1, 1, 1]} : vector<16x8x8xf32> to vector<16x8x1xf32>
    %66 = vector.extract_strided_slice %53 {offsets = [0, 1, 0], sizes = [16, 1, 8], strides = [1, 1, 1]} : vector<16x8x8xf32> to vector<16x1x8xf32>
    %67 = vector.broadcast %65 : vector<16x8x1xf32> to vector<16x8x8xf32>
    %68 = vector.broadcast %66 : vector<16x1x8xf32> to vector<16x8x8xf32>
    %69 = arith.mulf %67, %68 : vector<16x8x8xf32>
    %70 = arith.addf %64, %69 : vector<16x8x8xf32>
    %71 = vector.extract_strided_slice %44 {offsets = [0, 0, 2], sizes = [16, 8, 1], strides = [1, 1, 1]} : vector<16x8x8xf32> to vector<16x8x1xf32>
    %72 = vector.extract_strided_slice %53 {offsets = [0, 2, 0], sizes = [16, 1, 8], strides = [1, 1, 1]} : vector<16x8x8xf32> to vector<16x1x8xf32>
    %73 = vector.broadcast %71 : vector<16x8x1xf32> to vector<16x8x8xf32>
    %74 = vector.broadcast %72 : vector<16x1x8xf32> to vector<16x8x8xf32>
    %75 = arith.mulf %73, %74 : vector<16x8x8xf32>
    %76 = arith.addf %70, %75 : vector<16x8x8xf32>
    %77 = vector.extract_strided_slice %44 {offsets = [0, 0, 3], sizes = [16, 8, 1], strides = [1, 1, 1]} : vector<16x8x8xf32> to vector<16x8x1xf32>
    %78 = vector.extract_strided_slice %53 {offsets = [0, 3, 0], sizes = [16, 1, 8], strides = [1, 1, 1]} : vector<16x8x8xf32> to vector<16x1x8xf32>
    %79 = vector.broadcast %77 : vector<16x8x1xf32> to vector<16x8x8xf32>
    %80 = vector.broadcast %78 : vector<16x1x8xf32> to vector<16x8x8xf32>
    %81 = arith.mulf %79, %80 : vector<16x8x8xf32>
    %82 = arith.addf %76, %81 : vector<16x8x8xf32>
    %83 = vector.extract_strided_slice %44 {offsets = [0, 0, 4], sizes = [16, 8, 1], strides = [1, 1, 1]} : vector<16x8x8xf32> to vector<16x8x1xf32>
    %84 = vector.extract_strided_slice %53 {offsets = [0, 4, 0], sizes = [16, 1, 8], strides = [1, 1, 1]} : vector<16x8x8xf32> to vector<16x1x8xf32>
    %85 = vector.broadcast %83 : vector<16x8x1xf32> to vector<16x8x8xf32>
    %86 = vector.broadcast %84 : vector<16x1x8xf32> to vector<16x8x8xf32>
    %87 = arith.mulf %85, %86 : vector<16x8x8xf32>
    %88 = arith.addf %82, %87 : vector<16x8x8xf32>
    %89 = vector.extract_strided_slice %44 {offsets = [0, 0, 5], sizes = [16, 8, 1], strides = [1, 1, 1]} : vector<16x8x8xf32> to vector<16x8x1xf32>
    %90 = vector.extract_strided_slice %53 {offsets = [0, 5, 0], sizes = [16, 1, 8], strides = [1, 1, 1]} : vector<16x8x8xf32> to vector<16x1x8xf32>
    %91 = vector.broadcast %89 : vector<16x8x1xf32> to vector<16x8x8xf32>
    %92 = vector.broadcast %90 : vector<16x1x8xf32> to vector<16x8x8xf32>
    %93 = arith.mulf %91, %92 : vector<16x8x8xf32>
    %94 = arith.addf %88, %93 : vector<16x8x8xf32>
    %95 = vector.extract_strided_slice %44 {offsets = [0, 0, 6], sizes = [16, 8, 1], strides = [1, 1, 1]} : vector<16x8x8xf32> to vector<16x8x1xf32>
    %96 = vector.extract_strided_slice %53 {offsets = [0, 6, 0], sizes = [16, 1, 8], strides = [1, 1, 1]} : vector<16x8x8xf32> to vector<16x1x8xf32>
    %97 = vector.broadcast %95 : vector<16x8x1xf32> to vector<16x8x8xf32>
    %98 = vector.broadcast %96 : vector<16x1x8xf32> to vector<16x8x8xf32>
    %99 = arith.mulf %97, %98 : vector<16x8x8xf32>
    %100 = arith.addf %94, %99 : vector<16x8x8xf32>
    %101 = vector.extract_strided_slice %44 {offsets = [0, 0, 7], sizes = [16, 8, 1], strides = [1, 1, 1]} : vector<16x8x8xf32> to vector<16x8x1xf32>
    %102 = vector.extract_strided_slice %53 {offsets = [0, 7, 0], sizes = [16, 1, 8], strides = [1, 1, 1]} : vector<16x8x8xf32> to vector<16x1x8xf32>
    %103 = vector.broadcast %101 : vector<16x8x1xf32> to vector<16x8x8xf32>
    %104 = vector.broadcast %102 : vector<16x1x8xf32> to vector<16x8x8xf32>
    %105 = arith.mulf %103, %104 : vector<16x8x8xf32>
    %106 = arith.addf %100, %105 : vector<16x8x8xf32>
    %107 = vector.shape_cast %106 : vector<16x8x8xf32> to vector<16x64xf32>
    %cst_21 = arith.constant 0.000000e+00 : f32
    %108 = vector.broadcast %cst_21 : f32 to vector<16x56xf32>
    %109 = tpu.concatenate %20, %107, %108 in 1 : vector<16x8xf32>, vector<16x64xf32>, vector<16x56xf32> -> vector<16x128xf32>
    %c0_22 = arith.constant 0 : index
    %c0_23 = arith.constant 0 : index
    %110 = vector.load %arg8[%c0_22, %c0_23] : memref<16x128xf32, #tpu.memory_space<vmem>>, vector<16x128xf32>
    tpu.vector_store %arg8[%c0_22, %c0_23], %109 {strides = array<i32>} : memref<16x128xf32, #tpu.memory_space<vmem>>, vector<16x128xf32>,
    return
  }
  func.func @transform_0(%arg0: i32) -> (i32, i32) {
    %c0_i32 = arith.constant 0 : i32
    %c0_i32_0 = arith.constant 0 : i32
    return %arg0, %c0_i32 : i32, i32
  }
  func.func @transform_1(%arg0: i32) -> (i32, i32) {
    %c0_i32 = arith.constant 0 : i32
    %c0_i32_0 = arith.constant 0 : i32
    %c0_i32_1 = arith.constant 0 : i32
    return %c0_i32, %c0_i32_0 : i32, i32
  }
  func.func @transform_2(%arg0: i32) -> (i32, i32) {
    %c0_i32 = arith.constant 0 : i32
    %c0_i32_0 = arith.constant 0 : i32
    %c0_i32_1 = arith.constant 0 : i32
    return %c0_i32, %c0_i32_0 : i32, i32
  }
  func.func @transform_3(%arg0: i32) -> (i32, i32) {
    %c0_i32 = arith.constant 0 : i32
    %c0_i32_0 = arith.constant 0 : i32
    %c0_i32_1 = arith.constant 0 : i32
    return %c0_i32, %c0_i32_0 : i32, i32
  }
  func.func @transform_4(%arg0: i32) -> (i32, i32) {
    %c0_i32 = arith.constant 0 : i32
    %c0_i32_0 = arith.constant 0 : i32
    %c0_i32_1 = arith.constant 0 : i32
    return %c0_i32, %c0_i32_0 : i32, i32
  }
  func.func @transform_5(%arg0: i32) -> (i32, i32) {
    %c0_i32 = arith.constant 0 : i32
    %c0_i32_0 = arith.constant 0 : i32
    %c0_i32_1 = arith.constant 0 : i32
    return %c0_i32, %c0_i32_0 : i32, i32
  }
  func.func @transform_6(%arg0: i32) -> (i32, i32) {
    %c0_i32 = arith.constant 0 : i32
    %c0_i32_0 = arith.constant 0 : i32
    %c0_i32_1 = arith.constant 0 : i32
    return %c0_i32, %c0_i32_0 : i32, i32
  }
  func.func @transform_7(%arg0: i32) -> (i32, i32) {
    %c0_i32 = arith.constant 0 : i32
    %c0_i32_0 = arith.constant 0 : i32
    return %arg0, %c0_i32 : i32, i32
  }
}

</mosaic_0001>

<llo_original>
// kernel: encoder_forward.1
$region0: #{encoder_forward.1}
  #allocation0 [shape = 'u32[]', space=smem, size = 0x4, offset = 0x4, fixed_abs, tag = 'smem constant byte address 0x4 - core index']
  #allocation1 [shape = 'u32[144,128]{1,0:T(1,128)}', space=vmem, size = 0x12000, scoped, tag = 'internal scratch']
  %s0 = inlined_call_operand.vmem [shape: f32[16,32], index: 0, kind: input, shape index: {}]
  %s1 = inlined_call_operand.vmem [shape: f32[32,128], index: 1, kind: input, shape index: {}]
  %s2 = inlined_call_operand.vmem [shape: f32[1,128], index: 2, kind: input, shape index: {}]
  %s3 = inlined_call_operand.vmem [shape: f32[128,128], index: 3, kind: input, shape index: {}]
  %s4 = inlined_call_operand.vmem [shape: f32[1,128], index: 4, kind: input, shape index: {}]
  %s5 = inlined_call_operand.vmem [shape: f32[128,256], index: 5, kind: input, shape index: {}]
  %s6 = inlined_call_operand.vmem [shape: f32[1,256], index: 6, kind: input, shape index: {}]
  %s7 = inlined_call_operand.vmem [shape: f32[16,128], index: 7, kind: output, shape index: {}]
  %s8 = sld [smem:[#allocation0]]
  $region38: #{encoder_forward.1} parent=0
    _
  %s10 = ssub.s32 1, %s8
  %s11 = scalar_select 0, %s10, %s8
  // Predicated region
  $region2: #{encoder_forward.1} parent=0 // pred_check
    _
  $region3: #{encoder_forward.1} parent=0 // pred_check_branch
    %13 = sbr.rel (0) target = $region5
  $region4: #{encoder_forward.1} parent=0 // pred_region
    _
  $region5: #{encoder_forward.1} parent=0 // pred_fallthru
    _
  // Predicated region
  $region6: #{encoder_forward.1} parent=0 // pred_check
    _
  $region7: #{encoder_forward.1} parent=0 // pred_check_branch
    %15 = sbr.rel (0) target = $region9
  $region8: #{encoder_forward.1} parent=0 // pred_region
    _
  $region9: #{encoder_forward.1} parent=0 // pred_fallthru
    _
  // Predicated region
  $region10: #{encoder_forward.1} parent=0 // pred_check
    _
  $region11: #{encoder_forward.1} parent=0 // pred_check_branch
    %17 = sbr.rel (0) target = $region13
  $region12: #{encoder_forward.1} parent=0 // pred_region
    _
  $region13: #{encoder_forward.1} parent=0 // pred_fallthru
    _
  // Predicated region
  $region14: #{encoder_forward.1} parent=0 // pred_check
    _
  $region15: #{encoder_forward.1} parent=0 // pred_check_branch
    %19 = sbr.rel (0) target = $region17
  $region16: #{encoder_forward.1} parent=0 // pred_region
    _
  $region17: #{encoder_forward.1} parent=0 // pred_fallthru
    _
  // Predicated region
  $region18: #{encoder_forward.1} parent=0 // pred_check
    _
  $region19: #{encoder_forward.1} parent=0 // pred_check_branch
    %21 = sbr.rel (0) target = $region21
  $region20: #{encoder_forward.1} parent=0 // pred_region
    _
  $region21: #{encoder_forward.1} parent=0 // pred_fallthru
    _
  // Predicated region
  $region22: #{encoder_forward.1} parent=0 // pred_check
    _
  $region23: #{encoder_forward.1} parent=0 // pred_check_branch
    %23 = sbr.rel (0) target = $region25
  $region24: #{encoder_forward.1} parent=0 // pred_region
    _
  $region25: #{encoder_forward.1} parent=0 // pred_fallthru
    _
  // Predicated region
  $region26: #{encoder_forward.1} parent=0 // pred_check
    _
  $region27: #{encoder_forward.1} parent=0 // pred_check_branch
    %25 = sbr.rel (0) target = $region29
  $region28: #{encoder_forward.1} parent=0 // pred_region
    _
  $region29: #{encoder_forward.1} parent=0 // pred_fallthru
    _
  %v26 = vld [vmem:[%s0] sm:$0xff]
  %v27 = vld [vmem:[%s0 + $0x8] sm:$0xff]
  %v28 = vld [vmem:[%s1] sm:$0xff]
  %v29 = vld [vmem:[%s1 + $0x8] sm:$0xff]
  %v30 = vld [vmem:[%s1 + $0x10] sm:$0xff]
  %v31 = vld [vmem:[%s1 + $0x18] sm:$0xff]
  %v32 = vld [vmem:[%s3] sm:$0xff]
  %v33 = vld [vmem:[%s3 + $0x8] sm:$0xff]
  %v34 = vld [vmem:[%s3 + $0x10] sm:$0xff]
  %v35 = vld [vmem:[%s3 + $0x18] sm:$0xff]
  %v36 = vld [vmem:[%s3 + $0x20] sm:$0xff]
  %v37 = vld [vmem:[%s3 + $0x28] sm:$0xff]
  %v38 = vld [vmem:[%s3 + $0x30] sm:$0xff]
  %v39 = vld [vmem:[%s3 + $0x38] sm:$0xff]
  %v40 = vld [vmem:[%s3 + $0x40] sm:$0xff]
  %v41 = vld [vmem:[%s3 + $0x48] sm:$0xff]
  %v42 = vld [vmem:[%s3 + $0x50] sm:$0xff]
  %v43 = vld [vmem:[%s3 + $0x58] sm:$0xff]
  %v44 = vld [vmem:[%s3 + $0x60] sm:$0xff]
  %v45 = vld [vmem:[%s3 + $0x68] sm:$0xff]
  %v46 = vld [vmem:[%s3 + $0x70] sm:$0xff]
  %v47 = vld [vmem:[%s3 + $0x78] sm:$0xff]
  %v48 = vld [vmem:[%s5] sm:$0xff]
  %v49 = vld [vmem:[%s5 + $0x8] sm:$0xff]
  %v50 = vld [vmem:[%s5 + $0x10] sm:$0xff]
  %v51 = vld [vmem:[%s5 + $0x18] sm:$0xff]
  %v52 = vld [vmem:[%s5 + $0x20] sm:$0xff]
  %v53 = vld [vmem:[%s5 + $0x28] sm:$0xff]
  %v54 = vld [vmem:[%s5 + $0x30] sm:$0xff]
  %v55 = vld [vmem:[%s5 + $0x38] sm:$0xff]
  %v56 = vld [vmem:[%s5 + $0x40] sm:$0xff]
  %v57 = vld [vmem:[%s5 + $0x48] sm:$0xff]
  %v58 = vld [vmem:[%s5 + $0x50] sm:$0xff]
  %v59 = vld [vmem:[%s5 + $0x58] sm:$0xff]
  %v60 = vld [vmem:[%s5 + $0x60] sm:$0xff]
  %v61 = vld [vmem:[%s5 + $0x68] sm:$0xff]
  %v62 = vld [vmem:[%s5 + $0x70] sm:$0xff]
  %v63 = vld [vmem:[%s5 + $0x78] sm:$0xff]
  %v64 = vld [vmem:[%s5 + $0x80] sm:$0xff]
  %v65 = vld [vmem:[%s5 + $0x88] sm:$0xff]
  %v66 = vld [vmem:[%s5 + $0x90] sm:$0xff]
  %v67 = vld [vmem:[%s5 + $0x98] sm:$0xff]
  %v68 = vld [vmem:[%s5 + $0xa0] sm:$0xff]
  %v69 = vld [vmem:[%s5 + $0xa8] sm:$0xff]
  %v70 = vld [vmem:[%s5 + $0xb0] sm:$0xff]
  %v71 = vld [vmem:[%s5 + $0xb8] sm:$0xff]
  %v72 = vld [vmem:[%s5 + $0xc0] sm:$0xff]
  %v73 = vld [vmem:[%s5 + $0xc8] sm:$0xff]
  %v74 = vld [vmem:[%s5 + $0xd0] sm:$0xff]
  %v75 = vld [vmem:[%s5 + $0xd8] sm:$0xff]
  %v76 = vld [vmem:[%s5 + $0xe0] sm:$0xff]
  %v77 = vld [vmem:[%s5 + $0xe8] sm:$0xff]
  %v78 = vld [vmem:[%s5 + $0xf0] sm:$0xff]
  %v79 = vld [vmem:[%s5 + $0xf8] sm:$0xff]
  %v80 = vld [vmem:[%s2] sm:$0x1]
  %v82 = vlaneseq
  %v83 = vshrl.u32 %v82, 7
  %v84 = vsub.s32 0, %v83
  %v85 = vrot.slane %v80, %v84
  %vm87 = vcmask 261120
  %v89 = vsel %vm87, %v26, 0
  %v92 = vsel %vm87, %v27, 0
  %94 = vmatprep.subr.mxu0 0.0
  %95 = vmatpush1.msra.mxu0 0.0
  %96 = vmatprep.subr.mxu0 0.0
  %97 = vmatpush1.msra.mxu0 0.0
  %98 = vmatprep.subr.mxu0 0.0
  %99 = vmatpush1.msra.mxu0 0.0
  %100 = vmatprep.subr.mxu0 0.0
  %101 = vmatpush1.msra.mxu0 0.0
  %102 = vmatprep.subr.mxu0 0.0
  %103 = vmatpush1.msra.mxu0 0.0
  %104 = vmatprep.subr.mxu0 0.0
  %105 = vmatpush1.msra.mxu0 0.0
  %106 = vmatprep.subr.mxu0 0.0
  %107 = vmatpush1.msra.mxu0 0.0
  %108 = vmatprep.subr.mxu0 0.0
  %109 = vmatpush1.msra.mxu0 0.0
  %110 = vmatprep.subr.mxu0 0.0
  %111 = vmatpush1.msra.mxu0 0.0
  %112 = vmatprep.subr.mxu0 0.0
  %113 = vmatpush1.msra.mxu0 0.0
  %114 = vmatprep.subr.mxu0 0.0
  %115 = vmatpush1.msra.mxu0 0.0
  %116 = vmatprep.subr.mxu0 0.0
  %117 = vmatpush1.msra.mxu0 0.0
  %118 = vmatprep.subr.mxu0 0.0
  %119 = vmatpush1.msra.mxu0 %v31
  %120 = vmatprep.subr.mxu0 0.0
  %121 = vmatpush1.msra.mxu0 %v30
  %122 = vmatprep.subr.mxu0 0.0
  %123 = vmatpush1.msra.mxu0 %v29
  %124 = vmatprep.subr.mxu0 0.0
  %125 = vmatpush1.msra.mxu0 %v28
  %126 = vmatprep.subr.mxu0 0.0
  %127 = vmatpush2.msra.mxu0 0.0
  %128 = vmatprep.subr.mxu0 0.0
  %129 = vmatpush2.msra.mxu0 0.0
  %130 = vmatprep.subr.mxu0 0.0
  %131 = vmatpush2.msra.mxu0 0.0
  %132 = vmatprep.subr.mxu0 0.0
  %133 = vmatpush2.msra.mxu0 0.0
  %134 = vmatprep.subr.mxu0 0.0
  %135 = vmatpush2.msra.mxu0 0.0
  %136 = vmatprep.subr.mxu0 0.0
  %137 = vmatpush2.msra.mxu0 0.0
  %138 = vmatprep.subr.mxu0 0.0
  %139 = vmatpush2.msra.mxu0 0.0
  %140 = vmatprep.subr.mxu0 0.0
  %141 = vmatpush2.msra.mxu0 0.0
  %142 = vmatprep.subr.mxu0 0.0
  %143 = vmatpush2.msra.mxu0 0.0
  %144 = vmatprep.subr.mxu0 0.0
  %145 = vmatpush2.msra.mxu0 0.0
  %146 = vmatprep.subr.mxu0 0.0
  %147 = vmatpush2.msra.mxu0 0.0
  %148 = vmatprep.subr.mxu0 0.0
  %149 = vmatpush2.msra.mxu0 0.0
  %150 = vmatprep.subr.mxu0 0.0
  %151 = vmatpush2.msra.mxu0 0.0
  %152 = vmatprep.subr.mxu0 0.0
  %153 = vmatpush2.msra.mxu0 0.0
  %154 = vmatprep.subr.mxu0 0.0
  %155 = vmatpush2.msra.mxu0 0.0
  %156 = vmatprep.subr.mxu0 0.0
  %157 = vmatpush2.msra.mxu0 0.0
  %158 = vmatprep.mubr.f32.mxu0 0.0
  %159 = vmatmul.mubr.f32.gmra.mxu0 %v89
  %v160 = vpop.f32.mrf.mxu0
  %v161 = vadd.f32 %v85, %v160
  %v162 = vpop.f32.mrf.mxu0
  %163 = vmatprep.mubr.f32.mxu0 0.0
  %164 = vmatmul.mubr.f32.gmra.mxu0 %v92
  %v165 = vpop.f32.mrf.mxu0
  %v166 = vadd.f32 %v85, %v165
  %v167 = vpop.f32.mrf.mxu0
  %168 = vdwg.mxu0
  %v169 = vmax.f32 %v161, 0.0
  %v170 = vmax.f32 %v166, 0.0
  %v171 = vld [vmem:[%s4] sm:$0x1]
  %v173 = vlaneseq
  %v174 = vshrl.u32 %v173, 7
  %v175 = vsub.s32 0, %v174
  %v176 = vrot.slane %v171, %v175
  %178 = vmatprep.subr.mxu0 0.0
  %179 = vmatpush1.msra.mxu0 %v47
  %180 = vmatprep.subr.mxu0 0.0
  %181 = vmatpush1.msra.mxu0 %v46
  %182 = vmatprep.subr.mxu0 0.0
  %183 = vmatpush1.msra.mxu0 %v45
  %184 = vmatprep.subr.mxu0 0.0
  %185 = vmatpush1.msra.mxu0 %v44
  %186 = vmatprep.subr.mxu0 0.0
  %187 = vmatpush1.msra.mxu0 %v43
  %188 = vmatprep.subr.mxu0 0.0
  %189 = vmatpush1.msra.mxu0 %v42
  %190 = vmatprep.subr.mxu0 0.0
  %191 = vmatpush1.msra.mxu0 %v41
  %192 = vmatprep.subr.mxu0 0.0
  %193 = vmatpush1.msra.mxu0 %v40
  %194 = vmatprep.subr.mxu0 0.0
  %195 = vmatpush1.msra.mxu0 %v39
  %196 = vmatprep.subr.mxu0 0.0
  %197 = vmatpush1.msra.mxu0 %v38
  %198 = vmatprep.subr.mxu0 0.0
  %199 = vmatpush1.msra.mxu0 %v37
  %200 = vmatprep.subr.mxu0 0.0
  %201 = vmatpush1.msra.mxu0 %v36
  %202 = vmatprep.subr.mxu0 0.0
  %203 = vmatpush1.msra.mxu0 %v35
  %204 = vmatprep.subr.mxu0 0.0
  %205 = vmatpush1.msra.mxu0 %v34
  %206 = vmatprep.subr.mxu0 0.0
  %207 = vmatpush1.msra.mxu0 %v33
  %208 = vmatprep.subr.mxu0 0.0
  %209 = vmatpush1.msra.mxu0 %v32
  %210 = vmatprep.subr.mxu0 0.0
  %211 = vmatpush2.msra.mxu0 0.0
  %212 = vmatprep.subr.mxu0 0.0
  %213 = vmatpush2.msra.mxu0 0.0
  %214 = vmatprep.subr.mxu0 0.0
  %215 = vmatpush2.msra.mxu0 0.0
  %216 = vmatprep.subr.mxu0 0.0
  %217 = vmatpush2.msra.mxu0 0.0
  %218 = vmatprep.subr.mxu0 0.0
  %219 = vmatpush2.msra.mxu0 0.0
  %220 = vmatprep.subr.mxu0 0.0
  %221 = vmatpush2.msra.mxu0 0.0
  %222 = vmatprep.subr.mxu0 0.0
  %223 = vmatpush2.msra.mxu0 0.0
  %224 = vmatprep.subr.mxu0 0.0
  %225 = vmatpush2.msra.mxu0 0.0
  %226 = vmatprep.subr.mxu0 0.0
  %227 = vmatpush2.msra.mxu0 0.0
  %228 = vmatprep.subr.mxu0 0.0
  %229 = vmatpush2.msra.mxu0 0.0
  %230 = vmatprep.subr.mxu0 0.0
  %231 = vmatpush2.msra.mxu0 0.0
  %232 = vmatprep.subr.mxu0 0.0
  %233 = vmatpush2.msra.mxu0 0.0
  %234 = vmatprep.subr.mxu0 0.0
  %235 = vmatpush2.msra.mxu0 0.0
  %236 = vmatprep.subr.mxu0 0.0
  %237 = vmatpush2.msra.mxu0 0.0
  %238 = vmatprep.subr.mxu0 0.0
  %239 = vmatpush2.msra.mxu0 0.0
  %240 = vmatprep.subr.mxu0 0.0
  %241 = vmatpush2.msra.mxu0 0.0
  %242 = vmatprep.mubr.f32.mxu0 0.0
  %243 = vmatmul.mubr.f32.gmra.mxu0 %v169
  %v244 = vpop.f32.mrf.mxu0
  %v245 = vadd.f32 %v176, %v244
  %v246 = vpop.f32.mrf.mxu0
  %247 = vmatprep.mubr.f32.mxu0 0.0
  %248 = vmatmul.mubr.f32.gmra.mxu0 %v170
  %v249 = vpop.f32.mrf.mxu0
  %v250 = vadd.f32 %v176, %v249
  %v251 = vpop.f32.mrf.mxu0
  %252 = vdwg.mxu0
  %v253 = vmax.f32 %v245, 0.0
  %v254 = vmax.f32 %v250, 0.0
  %v255 = vld [vmem:[%s6] sm:$0x3]
  %v257 = vlaneseq
  %v258 = vshrl.u32 %v257, 7
  %v259 = vsub.s32 0, %v258
  %v260 = vrot.slane %v255, %v259
  %v261 = vlaneseq
  %v262 = vshrl.u32 %v261, 7
  %v263 = vsub.s32 1, %v262
  %v264 = vrot.slane %v255, %v263
  %267 = vmatprep.subr.mxu0 %v79
  %268 = vmatpush1.msra.mxu0 %v78
  %269 = vmatprep.subr.mxu0 %v77
  %270 = vmatpush1.msra.mxu0 %v76
  %271 = vmatprep.subr.mxu0 %v75
  %272 = vmatpush1.msra.mxu0 %v74
  %273 = vmatprep.subr.mxu0 %v73
  %274 = vmatpush1.msra.mxu0 %v72
  %275 = vmatprep.subr.mxu0 %v71
  %276 = vmatpush1.msra.mxu0 %v70
  %277 = vmatprep.subr.mxu0 %v69
  %278 = vmatpush1.msra.mxu0 %v68
  %279 = vmatprep.subr.mxu0 %v67
  %280 = vmatpush1.msra.mxu0 %v66
  %281 = vmatprep.subr.mxu0 %v65
  %282 = vmatpush1.msra.mxu0 %v64
  %283 = vmatprep.subr.mxu0 %v63
  %284 = vmatpush1.msra.mxu0 %v62
  %285 = vmatprep.subr.mxu0 %v61
  %286 = vmatpush1.msra.mxu0 %v60
  %287 = vmatprep.subr.mxu0 %v59
  %288 = vmatpush1.msra.mxu0 %v58
  %289 = vmatprep.subr.mxu0 %v57
  %290 = vmatpush1.msra.mxu0 %v56
  %291 = vmatprep.subr.mxu0 %v55
  %292 = vmatpush1.msra.mxu0 %v54
  %293 = vmatprep.subr.mxu0 %v53
  %294 = vmatpush1.msra.mxu0 %v52
  %295 = vmatprep.subr.mxu0 %v51
  %296 = vmatpush1.msra.mxu0 %v50
  %297 = vmatprep.subr.mxu0 %v49
  %298 = vmatpush1.msra.mxu0 %v48
  %299 = vmatprep.subr.mxu0 0.0
  %300 = vmatpush2.msra.mxu0 0.0
  %301 = vmatprep.subr.mxu0 0.0
  %302 = vmatpush2.msra.mxu0 0.0
  %303 = vmatprep.subr.mxu0 0.0
  %304 = vmatpush2.msra.mxu0 0.0
  %305 = vmatprep.subr.mxu0 0.0
  %306 = vmatpush2.msra.mxu0 0.0
  %307 = vmatprep.subr.mxu0 0.0
  %308 = vmatpush2.msra.mxu0 0.0
  %309 = vmatprep.subr.mxu0 0.0
  %310 = vmatpush2.msra.mxu0 0.0
  %311 = vmatprep.subr.mxu0 0.0
  %312 = vmatpush2.msra.mxu0 0.0
  %313 = vmatprep.subr.mxu0 0.0
  %314 = vmatpush2.msra.mxu0 0.0
  %315 = vmatprep.subr.mxu0 0.0
  %316 = vmatpush2.msra.mxu0 0.0
  %317 = vmatprep.subr.mxu0 0.0
  %318 = vmatpush2.msra.mxu0 0.0
  %319 = vmatprep.subr.mxu0 0.0
  %320 = vmatpush2.msra.mxu0 0.0
  %321 = vmatprep.subr.mxu0 0.0
  %322 = vmatpush2.msra.mxu0 0.0
  %323 = vmatprep.subr.mxu0 0.0
  %324 = vmatpush2.msra.mxu0 0.0
  %325 = vmatprep.subr.mxu0 0.0
  %326 = vmatpush2.msra.mxu0 0.0
  %327 = vmatprep.subr.mxu0 0.0
  %328 = vmatpush2.msra.mxu0 0.0
  %329 = vmatprep.subr.mxu0 0.0
  %330 = vmatpush2.msra.mxu0 0.0
  %331 = vmatprep.mubr.f32.mxu0 0.0
  %332 = vmatmul.mubr.f32.gmra.mxu0 %v253
  %v333 = vpop.f32.mrf.mxu0
  %v334 = vadd.f32 %v260, %v333
  %v335 = vpop.f32.mrf.mxu0
  %v336 = vadd.f32 %v264, %v335
  %337 = vmatprep.mubr.f32.mxu0 0.0
  %338 = vmatmul.mubr.f32.gmra.mxu0 %v254
  %v339 = vpop.f32.mrf.mxu0
  %v340 = vadd.f32 %v260, %v339
  %v341 = vpop.f32.mrf.mxu0
  %v342 = vadd.f32 %v264, %v341
  %343 = vdwg.mxu0
  %v344 = vmul.f32 %v334, 1.442695
  %v345 = vpow.pop %v344
  %v346 = vmul.f32 %v340, 1.442695
  %v347 = vpow.pop %v346
  %350 = vrot.lane.b32.xlu0 %v334, 120
  %v351 = vpop.permute.xlu0 %350
  %352 = vrot.lane.b32.xlu0 %v340, 120
  %v353 = vpop.permute.xlu0 %352
  %354 = vrot.lane.b32.xlu0 %v334, 112
  %v355 = vpop.permute.xlu0 %354
  %356 = vrot.lane.b32.xlu0 %v340, 112
  %v357 = vpop.permute.xlu0 %356
  %358 = vrot.lane.b32.xlu0 %v334, 104
  %v359 = vpop.permute.xlu0 %358
  %360 = vrot.lane.b32.xlu0 %v340, 104
  %v361 = vpop.permute.xlu0 %360
  %362 = vrot.lane.b32.xlu0 %v334, 96
  %v363 = vpop.permute.xlu0 %362
  %364 = vrot.lane.b32.xlu0 %v340, 96
  %v365 = vpop.permute.xlu0 %364
  %366 = vrot.lane.b32.xlu0 %v334, 88
  %v367 = vpop.permute.xlu0 %366
  %368 = vrot.lane.b32.xlu0 %v340, 88
  %v369 = vpop.permute.xlu0 %368
  %370 = vrot.lane.b32.xlu0 %v334, 80
  %v371 = vpop.permute.xlu0 %370
  %372 = vrot.lane.b32.xlu0 %v340, 80
  %v373 = vpop.permute.xlu0 %372
  %374 = vrot.lane.b32.xlu0 %v334, 72
  %v375 = vpop.permute.xlu0 %374
  %376 = vrot.lane.b32.xlu0 %v340, 72
  %v377 = vpop.permute.xlu0 %376
  %378 = vrot.lane.b32.xlu0 %v351, 112
  %v379 = vpop.permute.xlu0 %378
  %380 = vrot.lane.b32.xlu0 %v353, 112
  %v381 = vpop.permute.xlu0 %380
  %382 = vrot.lane.b32.xlu0 %v355, 112
  %v383 = vpop.permute.xlu0 %382
  %384 = vrot.lane.b32.xlu0 %v357, 112
  %v385 = vpop.permute.xlu0 %384
  %386 = vrot.lane.b32.xlu0 %v359, 112
  %v387 = vpop.permute.xlu0 %386
  %388 = vrot.lane.b32.xlu0 %v361, 112
  %v389 = vpop.permute.xlu0 %388
  %390 = vrot.lane.b32.xlu0 %v363, 112
  %v391 = vpop.permute.xlu0 %390
  %392 = vrot.lane.b32.xlu0 %v365, 112
  %v393 = vpop.permute.xlu0 %392
  %394 = vrot.lane.b32.xlu0 %v367, 112
  %v395 = vpop.permute.xlu0 %394
  %396 = vrot.lane.b32.xlu0 %v369, 112
  %v397 = vpop.permute.xlu0 %396
  %398 = vrot.lane.b32.xlu0 %v371, 112
  %v399 = vpop.permute.xlu0 %398
  %400 = vrot.lane.b32.xlu0 %v373, 112
  %v401 = vpop.permute.xlu0 %400
  %402 = vrot.lane.b32.xlu0 %v375, 112
  %v403 = vpop.permute.xlu0 %402
  %404 = vrot.lane.b32.xlu0 %v377, 112
  %v405 = vpop.permute.xlu0 %404
  %v422 = vcombine.low %v355, %v383
  %v423 = vcombine.high %v355, %v383
  %v425 = vunpack.c.l.s4 1983009808
  %v426 = vunpack.c.0.s8 %v425
  %v427 = vlaneseq
  %v428 = vshrl.u32 %v427, 7
  %v429 = vsub.s32 %v426, %v428
  %v430 = vrot.slane %v422, %v429
  %v432 = vunpack.c.l.s4 1983009808
  %v433 = vunpack.c.0.s8 %v432
  %v434 = vlaneseq
  %v435 = vshrl.u32 %v434, 7
  %v436 = vsub.s32 %v433, %v435
  %v437 = vrot.slane %v423, %v436
  %v438 = vcombine.low %v379, %v387
  %v439 = vcombine.high %v379, %v387
  %v441 = vunpack.c.l.s4 1983009808
  %v442 = vunpack.c.0.s8 %v441
  %v443 = vlaneseq
  %v444 = vshrl.u32 %v443, 7
  %v445 = vsub.s32 %v442, %v444
  %v446 = vrot.slane %v438, %v445
  %v448 = vunpack.c.l.s4 1983009808
  %v449 = vunpack.c.0.s8 %v448
  %v450 = vlaneseq
  %v451 = vshrl.u32 %v450, 7
  %v452 = vsub.s32 %v449, %v451
  %v453 = vrot.slane %v439, %v452
  %v454 = vcombine.low %v391, %v399
  %v455 = vcombine.high %v391, %v399
  %v457 = vunpack.c.l.s4 1983009808
  %v458 = vunpack.c.0.s8 %v457
  %v459 = vlaneseq
  %v460 = vshrl.u32 %v459, 7
  %v461 = vsub.s32 %v458, %v460
  %v462 = vrot.slane %v454, %v461
  %v464 = vunpack.c.l.s4 1983009808
  %v465 = vunpack.c.0.s8 %v464
  %v466 = vlaneseq
  %v467 = vshrl.u32 %v466, 7
  %v468 = vsub.s32 %v465, %v467
  %v469 = vrot.slane %v455, %v468
  %v470 = vcombine.low %v395, %v403
  %v471 = vcombine.high %v395, %v403
  %v473 = vunpack.c.l.s4 1983009808
  %v474 = vunpack.c.0.s8 %v473
  %v475 = vlaneseq
  %v476 = vshrl.u32 %v475, 7
  %v477 = vsub.s32 %v474, %v476
  %v478 = vrot.slane %v470, %v477
  %v480 = vunpack.c.l.s4 1983009808
  %v481 = vunpack.c.0.s8 %v480
  %v482 = vlaneseq
  %v483 = vshrl.u32 %v482, 7
  %v484 = vsub.s32 %v481, %v483
  %v485 = vrot.slane %v471, %v484
  %v486 = vcombine.low %v430, %v446
  %v487 = vcombine.high %v430, %v446
  %v489 = vunpack.c.l.s4 1934713408
  %v490 = vunpack.c.0.s8 %v489
  %v491 = vlaneseq
  %v492 = vshrl.u32 %v491, 7
  %v493 = vsub.s32 %v490, %v492
  %v494 = vrot.slane %v486, %v493
  %v496 = vunpack.c.l.s4 1934713408
  %v497 = vunpack.c.0.s8 %v496
  %v498 = vlaneseq
  %v499 = vshrl.u32 %v498, 7
  %v500 = vsub.s32 %v497, %v499
  %v501 = vrot.slane %v487, %v500
  %v502 = vcombine.low %v437, %v453
  %v503 = vcombine.high %v437, %v453
  %v505 = vunpack.c.l.s4 1934713408
  %v506 = vunpack.c.0.s8 %v505
  %v507 = vlaneseq
  %v508 = vshrl.u32 %v507, 7
  %v509 = vsub.s32 %v506, %v508
  %v510 = vrot.slane %v502, %v509
  %v512 = vunpack.c.l.s4 1934713408
  %v513 = vunpack.c.0.s8 %v512
  %v514 = vlaneseq
  %v515 = vshrl.u32 %v514, 7
  %v516 = vsub.s32 %v513, %v515
  %v517 = vrot.slane %v503, %v516
  %v518 = vcombine.low %v462, %v478
  %v519 = vcombine.high %v462, %v478
  %v521 = vunpack.c.l.s4 1934713408
  %v522 = vunpack.c.0.s8 %v521
  %v523 = vlaneseq
  %v524 = vshrl.u32 %v523, 7
  %v525 = vsub.s32 %v522, %v524
  %v526 = vrot.slane %v518, %v525
  %v528 = vunpack.c.l.s4 1934713408
  %v529 = vunpack.c.0.s8 %v528
  %v530 = vlaneseq
  %v531 = vshrl.u32 %v530, 7
  %v532 = vsub.s32 %v529, %v531
  %v533 = vrot.slane %v519, %v532
  %v534 = vcombine.low %v469, %v485
  %v535 = vcombine.high %v469, %v485
  %v537 = vunpack.c.l.s4 1934713408
  %v538 = vunpack.c.0.s8 %v537
  %v539 = vlaneseq
  %v540 = vshrl.u32 %v539, 7
  %v541 = vsub.s32 %v538, %v540
  %v542 = vrot.slane %v534, %v541
  %v544 = vunpack.c.l.s4 1934713408
  %v545 = vunpack.c.0.s8 %v544
  %v546 = vlaneseq
  %v547 = vshrl.u32 %v546, 7
  %v548 = vsub.s32 %v545, %v547
  %v549 = vrot.slane %v535, %v548
  %v550 = vcombine.low %v494, %v526
  %v551 = vcombine.high %v494, %v526
  %v552 = vcombine.low %v501, %v533
  %v553 = vcombine.high %v501, %v533
  %v554 = vcombine.low %v510, %v542
  %v555 = vcombine.high %v510, %v542
  %v556 = vcombine.low %v517, %v549
  %v557 = vcombine.high %v517, %v549
  %v558 = vcombine.low %v357, %v385
  %v559 = vcombine.high %v357, %v385
  %v561 = vunpack.c.l.s4 1983009808
  %v562 = vunpack.c.0.s8 %v561
  %v563 = vlaneseq
  %v564 = vshrl.u32 %v563, 7
  %v565 = vsub.s32 %v562, %v564
  %v566 = vrot.slane %v558, %v565
  %v568 = vunpack.c.l.s4 1983009808
  %v569 = vunpack.c.0.s8 %v568
  %v570 = vlaneseq
  %v571 = vshrl.u32 %v570, 7
  %v572 = vsub.s32 %v569, %v571
  %v573 = vrot.slane %v559, %v572
  %v574 = vcombine.low %v381, %v389
  %v575 = vcombine.high %v381, %v389
  %v577 = vunpack.c.l.s4 1983009808
  %v578 = vunpack.c.0.s8 %v577
  %v579 = vlaneseq
  %v580 = vshrl.u32 %v579, 7
  %v581 = vsub.s32 %v578, %v580
  %v582 = vrot.slane %v574, %v581
  %v584 = vunpack.c.l.s4 1983009808
  %v585 = vunpack.c.0.s8 %v584
  %v586 = vlaneseq
  %v587 = vshrl.u32 %v586, 7
  %v588 = vsub.s32 %v585, %v587
  %v589 = vrot.slane %v575, %v588
  %v590 = vcombine.low %v393, %v401
  %v591 = vcombine.high %v393, %v401
  %v593 = vunpack.c.l.s4 1983009808
  %v594 = vunpack.c.0.s8 %v593
  %v595 = vlaneseq
  %v596 = vshrl.u32 %v595, 7
  %v597 = vsub.s32 %v594, %v596
  %v598 = vrot.slane %v590, %v597
  %v600 = vunpack.c.l.s4 1983009808
  %v601 = vunpack.c.0.s8 %v600
  %v602 = vlaneseq
  %v603 = vshrl.u32 %v602, 7
  %v604 = vsub.s32 %v601, %v603
  %v605 = vrot.slane %v591, %v604
  %v606 = vcombine.low %v397, %v405
  %v607 = vcombine.high %v397, %v405
  %v609 = vunpack.c.l.s4 1983009808
  %v610 = vunpack.c.0.s8 %v609
  %v611 = vlaneseq
  %v612 = vshrl.u32 %v611, 7
  %v613 = vsub.s32 %v610, %v612
  %v614 = vrot.slane %v606, %v613
  %v616 = vunpack.c.l.s4 1983009808
  %v617 = vunpack.c.0.s8 %v616
  %v618 = vlaneseq
  %v619 = vshrl.u32 %v618, 7
  %v620 = vsub.s32 %v617, %v619
  %v621 = vrot.slane %v607, %v620
  %v622 = vcombine.low %v566, %v582
  %v623 = vcombine.high %v566, %v582
  %v625 = vunpack.c.l.s4 1934713408
  %v626 = vunpack.c.0.s8 %v625
  %v627 = vlaneseq
  %v628 = vshrl.u32 %v627, 7
  %v629 = vsub.s32 %v626, %v628
  %v630 = vrot.slane %v622, %v629
  %v632 = vunpack.c.l.s4 1934713408
  %v633 = vunpack.c.0.s8 %v632
  %v634 = vlaneseq
  %v635 = vshrl.u32 %v634, 7
  %v636 = vsub.s32 %v633, %v635
  %v637 = vrot.slane %v623, %v636
  %v638 = vcombine.low %v573, %v589
  %v639 = vcombine.high %v573, %v589
  %v641 = vunpack.c.l.s4 1934713408
  %v642 = vunpack.c.0.s8 %v641
  %v643 = vlaneseq
  %v644 = vshrl.u32 %v643, 7
  %v645 = vsub.s32 %v642, %v644
  %v646 = vrot.slane %v638, %v645
  %v648 = vunpack.c.l.s4 1934713408
  %v649 = vunpack.c.0.s8 %v648
  %v650 = vlaneseq
  %v651 = vshrl.u32 %v650, 7
  %v652 = vsub.s32 %v649, %v651
  %v653 = vrot.slane %v639, %v652
  %v654 = vcombine.low %v598, %v614
  %v655 = vcombine.high %v598, %v614
  %v657 = vunpack.c.l.s4 1934713408
  %v658 = vunpack.c.0.s8 %v657
  %v659 = vlaneseq
  %v660 = vshrl.u32 %v659, 7
  %v661 = vsub.s32 %v658, %v660
  %v662 = vrot.slane %v654, %v661
  %v664 = vunpack.c.l.s4 1934713408
  %v665 = vunpack.c.0.s8 %v664
  %v666 = vlaneseq
  %v667 = vshrl.u32 %v666, 7
  %v668 = vsub.s32 %v665, %v667
  %v669 = vrot.slane %v655, %v668
  %v670 = vcombine.low %v605, %v621
  %v671 = vcombine.high %v605, %v621
  %v673 = vunpack.c.l.s4 1934713408
  %v674 = vunpack.c.0.s8 %v673
  %v675 = vlaneseq
  %v676 = vshrl.u32 %v675, 7
  %v677 = vsub.s32 %v674, %v676
  %v678 = vrot.slane %v670, %v677
  %v680 = vunpack.c.l.s4 1934713408
  %v681 = vunpack.c.0.s8 %v680
  %v682 = vlaneseq
  %v683 = vshrl.u32 %v682, 7
  %v684 = vsub.s32 %v681, %v683
  %v685 = vrot.slane %v671, %v684
  %v686 = vcombine.low %v630, %v662
  %v687 = vcombine.high %v630, %v662
  %v688 = vcombine.low %v637, %v669
  %v689 = vcombine.high %v637, %v669
  %v690 = vcombine.low %v646, %v678
  %v691 = vcombine.high %v646, %v678
  %v692 = vcombine.low %v653, %v685
  %v693 = vcombine.high %v653, %v685
  %696 = vrot.lane.b32.xlu0 %v336, 80
  %v697 = vpop.permute.xlu0 %696
  %698 = vrot.lane.b32.xlu0 %v342, 80
  %v699 = vpop.permute.xlu0 %698
  %700 = vrot.lane.b32.xlu0 %v336, 72
  %v701 = vpop.permute.xlu0 %700
  %702 = vrot.lane.b32.xlu0 %v342, 72
  %v703 = vpop.permute.xlu0 %702
  %704 = vrot.lane.b32.xlu0 %v334, 48
  %v705 = vpop.permute.xlu0 %704
  %706 = vrot.lane.b32.xlu0 %v340, 48
  %v707 = vpop.permute.xlu0 %706
  %708 = vrot.lane.b32.xlu0 %v351, 48
  %v709 = vpop.permute.xlu0 %708
  %710 = vrot.lane.b32.xlu0 %v353, 48
  %v711 = vpop.permute.xlu0 %710
  %712 = vrot.lane.b32.xlu0 %v355, 48
  %v713 = vpop.permute.xlu0 %712
  %714 = vrot.lane.b32.xlu0 %v357, 48
  %v715 = vpop.permute.xlu0 %714
  %716 = vrot.lane.b32.xlu0 %v359, 48
  %v717 = vpop.permute.xlu0 %716
  %718 = vrot.lane.b32.xlu0 %v361, 48
  %v719 = vpop.permute.xlu0 %718
  %720 = vrot.lane.b32.xlu0 %v363, 48
  %v721 = vpop.permute.xlu0 %720
  %722 = vrot.lane.b32.xlu0 %v365, 48
  %v723 = vpop.permute.xlu0 %722
  %724 = vrot.lane.b32.xlu0 %v367, 48
  %v725 = vpop.permute.xlu0 %724
  %726 = vrot.lane.b32.xlu0 %v369, 48
  %v727 = vpop.permute.xlu0 %726
  %728 = vrot.lane.b32.xlu0 %v697, 48
  %v729 = vpop.permute.xlu0 %728
  %730 = vrot.lane.b32.xlu0 %v699, 48
  %v731 = vpop.permute.xlu0 %730
  %732 = vrot.lane.b32.xlu0 %v701, 48
  %v733 = vpop.permute.xlu0 %732
  %734 = vrot.lane.b32.xlu0 %v703, 48
  %v735 = vpop.permute.xlu0 %734
  %v752 = vcombine.low %v705, %v713
  %v753 = vcombine.high %v705, %v713
  %v755 = vunpack.c.l.s4 1983009808
  %v756 = vunpack.c.0.s8 %v755
  %v757 = vlaneseq
  %v758 = vshrl.u32 %v757, 7
  %v759 = vsub.s32 %v756, %v758
  %v760 = vrot.slane %v752, %v759
  %v762 = vunpack.c.l.s4 1983009808
  %v763 = vunpack.c.0.s8 %v762
  %v764 = vlaneseq
  %v765 = vshrl.u32 %v764, 7
  %v766 = vsub.s32 %v763, %v765
  %v767 = vrot.slane %v753, %v766
  %v768 = vcombine.low %v709, %v717
  %v769 = vcombine.high %v709, %v717
  %v771 = vunpack.c.l.s4 1983009808
  %v772 = vunpack.c.0.s8 %v771
  %v773 = vlaneseq
  %v774 = vshrl.u32 %v773, 7
  %v775 = vsub.s32 %v772, %v774
  %v776 = vrot.slane %v768, %v775
  %v778 = vunpack.c.l.s4 1983009808
  %v779 = vunpack.c.0.s8 %v778
  %v780 = vlaneseq
  %v781 = vshrl.u32 %v780, 7
  %v782 = vsub.s32 %v779, %v781
  %v783 = vrot.slane %v769, %v782
  %v784 = vcombine.low %v721, %v729
  %v785 = vcombine.high %v721, %v729
  %v787 = vunpack.c.l.s4 1983009808
  %v788 = vunpack.c.0.s8 %v787
  %v789 = vlaneseq
  %v790 = vshrl.u32 %v789, 7
  %v791 = vsub.s32 %v788, %v790
  %v792 = vrot.slane %v784, %v791
  %v794 = vunpack.c.l.s4 1983009808
  %v795 = vunpack.c.0.s8 %v794
  %v796 = vlaneseq
  %v797 = vshrl.u32 %v796, 7
  %v798 = vsub.s32 %v795, %v797
  %v799 = vrot.slane %v785, %v798
  %v800 = vcombine.low %v725, %v733
  %v801 = vcombine.high %v725, %v733
  %v803 = vunpack.c.l.s4 1983009808
  %v804 = vunpack.c.0.s8 %v803
  %v805 = vlaneseq
  %v806 = vshrl.u32 %v805, 7
  %v807 = vsub.s32 %v804, %v806
  %v808 = vrot.slane %v800, %v807
  %v810 = vunpack.c.l.s4 1983009808
  %v811 = vunpack.c.0.s8 %v810
  %v812 = vlaneseq
  %v813 = vshrl.u32 %v812, 7
  %v814 = vsub.s32 %v811, %v813
  %v815 = vrot.slane %v801, %v814
  %v816 = vcombine.low %v760, %v776
  %v817 = vcombine.high %v760, %v776
  %v819 = vunpack.c.l.s4 1934713408
  %v820 = vunpack.c.0.s8 %v819
  %v821 = vlaneseq
  %v822 = vshrl.u32 %v821, 7
  %v823 = vsub.s32 %v820, %v822
  %v824 = vrot.slane %v816, %v823
  %v826 = vunpack.c.l.s4 1934713408
  %v827 = vunpack.c.0.s8 %v826
  %v828 = vlaneseq
  %v829 = vshrl.u32 %v828, 7
  %v830 = vsub.s32 %v827, %v829
  %v831 = vrot.slane %v817, %v830
  %v832 = vcombine.low %v767, %v783
  %v833 = vcombine.high %v767, %v783
  %v835 = vunpack.c.l.s4 1934713408
  %v836 = vunpack.c.0.s8 %v835
  %v837 = vlaneseq
  %v838 = vshrl.u32 %v837, 7
  %v839 = vsub.s32 %v836, %v838
  %v840 = vrot.slane %v832, %v839
  %v842 = vunpack.c.l.s4 1934713408
  %v843 = vunpack.c.0.s8 %v842
  %v844 = vlaneseq
  %v845 = vshrl.u32 %v844, 7
  %v846 = vsub.s32 %v843, %v845
  %v847 = vrot.slane %v833, %v846
  %v848 = vcombine.low %v792, %v808
  %v849 = vcombine.high %v792, %v808
  %v851 = vunpack.c.l.s4 1934713408
  %v852 = vunpack.c.0.s8 %v851
  %v853 = vlaneseq
  %v854 = vshrl.u32 %v853, 7
  %v855 = vsub.s32 %v852, %v854
  %v856 = vrot.slane %v848, %v855
  %v858 = vunpack.c.l.s4 1934713408
  %v859 = vunpack.c.0.s8 %v858
  %v860 = vlaneseq
  %v861 = vshrl.u32 %v860, 7
  %v862 = vsub.s32 %v859, %v861
  %v863 = vrot.slane %v849, %v862
  %v864 = vcombine.low %v799, %v815
  %v865 = vcombine.high %v799, %v815
  %v867 = vunpack.c.l.s4 1934713408
  %v868 = vunpack.c.0.s8 %v867
  %v869 = vlaneseq
  %v870 = vshrl.u32 %v869, 7
  %v871 = vsub.s32 %v868, %v870
  %v872 = vrot.slane %v864, %v871
  %v874 = vunpack.c.l.s4 1934713408
  %v875 = vunpack.c.0.s8 %v874
  %v876 = vlaneseq
  %v877 = vshrl.u32 %v876, 7
  %v878 = vsub.s32 %v875, %v877
  %v879 = vrot.slane %v865, %v878
  %v880 = vcombine.low %v824, %v856
  %v881 = vcombine.high %v824, %v856
  %v882 = vcombine.low %v831, %v863
  %v883 = vcombine.high %v831, %v863
  %v884 = vcombine.low %v840, %v872
  %v885 = vcombine.high %v840, %v872
  %v886 = vcombine.low %v847, %v879
  %v887 = vcombine.high %v847, %v879
  %v888 = vcombine.low %v707, %v715
  %v889 = vcombine.high %v707, %v715
  %v891 = vunpack.c.l.s4 1983009808
  %v892 = vunpack.c.0.s8 %v891
  %v893 = vlaneseq
  %v894 = vshrl.u32 %v893, 7
  %v895 = vsub.s32 %v892, %v894
  %v896 = vrot.slane %v888, %v895
  %v898 = vunpack.c.l.s4 1983009808
  %v899 = vunpack.c.0.s8 %v898
  %v900 = vlaneseq
  %v901 = vshrl.u32 %v900, 7
  %v902 = vsub.s32 %v899, %v901
  %v903 = vrot.slane %v889, %v902
  %v904 = vcombine.low %v711, %v719
  %v905 = vcombine.high %v711, %v719
  %v907 = vunpack.c.l.s4 1983009808
  %v908 = vunpack.c.0.s8 %v907
  %v909 = vlaneseq
  %v910 = vshrl.u32 %v909, 7
  %v911 = vsub.s32 %v908, %v910
  %v912 = vrot.slane %v904, %v911
  %v914 = vunpack.c.l.s4 1983009808
  %v915 = vunpack.c.0.s8 %v914
  %v916 = vlaneseq
  %v917 = vshrl.u32 %v916, 7
  %v918 = vsub.s32 %v915, %v917
  %v919 = vrot.slane %v905, %v918
  %v920 = vcombine.low %v723, %v731
  %v921 = vcombine.high %v723, %v731
  %v923 = vunpack.c.l.s4 1983009808
  %v924 = vunpack.c.0.s8 %v923
  %v925 = vlaneseq
  %v926 = vshrl.u32 %v925, 7
  %v927 = vsub.s32 %v924, %v926
  %v928 = vrot.slane %v920, %v927
  %v930 = vunpack.c.l.s4 1983009808
  %v931 = vunpack.c.0.s8 %v930
  %v932 = vlaneseq
  %v933 = vshrl.u32 %v932, 7
  %v934 = vsub.s32 %v931, %v933
  %v935 = vrot.slane %v921, %v934
  %v936 = vcombine.low %v727, %v735
  %v937 = vcombine.high %v727, %v735
  %v939 = vunpack.c.l.s4 1983009808
  %v940 = vunpack.c.0.s8 %v939
  %v941 = vlaneseq
  %v942 = vshrl.u32 %v941, 7
  %v943 = vsub.s32 %v940, %v942
  %v944 = vrot.slane %v936, %v943
  %v946 = vunpack.c.l.s4 1983009808
  %v947 = vunpack.c.0.s8 %v946
  %v948 = vlaneseq
  %v949 = vshrl.u32 %v948, 7
  %v950 = vsub.s32 %v947, %v949
  %v951 = vrot.slane %v937, %v950
  %v952 = vcombine.low %v896, %v912
  %v953 = vcombine.high %v896, %v912
  %v955 = vunpack.c.l.s4 1934713408
  %v956 = vunpack.c.0.s8 %v955
  %v957 = vlaneseq
  %v958 = vshrl.u32 %v957, 7
  %v959 = vsub.s32 %v956, %v958
  %v960 = vrot.slane %v952, %v959
  %v962 = vunpack.c.l.s4 1934713408
  %v963 = vunpack.c.0.s8 %v962
  %v964 = vlaneseq
  %v965 = vshrl.u32 %v964, 7
  %v966 = vsub.s32 %v963, %v965
  %v967 = vrot.slane %v953, %v966
  %v968 = vcombine.low %v903, %v919
  %v969 = vcombine.high %v903, %v919
  %v971 = vunpack.c.l.s4 1934713408
  %v972 = vunpack.c.0.s8 %v971
  %v973 = vlaneseq
  %v974 = vshrl.u32 %v973, 7
  %v975 = vsub.s32 %v972, %v974
  %v976 = vrot.slane %v968, %v975
  %v978 = vunpack.c.l.s4 1934713408
  %v979 = vunpack.c.0.s8 %v978
  %v980 = vlaneseq
  %v981 = vshrl.u32 %v980, 7
  %v982 = vsub.s32 %v979, %v981
  %v983 = vrot.slane %v969, %v982
  %v984 = vcombine.low %v928, %v944
  %v985 = vcombine.high %v928, %v944
  %v987 = vunpack.c.l.s4 1934713408
  %v988 = vunpack.c.0.s8 %v987
  %v989 = vlaneseq
  %v990 = vshrl.u32 %v989, 7
  %v991 = vsub.s32 %v988, %v990
  %v992 = vrot.slane %v984, %v991
  %v994 = vunpack.c.l.s4 1934713408
  %v995 = vunpack.c.0.s8 %v994
  %v996 = vlaneseq
  %v997 = vshrl.u32 %v996, 7
  %v998 = vsub.s32 %v995, %v997
  %v999 = vrot.slane %v985, %v998
  %v1000 = vcombine.low %v935, %v951
  %v1001 = vcombine.high %v935, %v951
  %v1003 = vunpack.c.l.s4 1934713408
  %v1004 = vunpack.c.0.s8 %v1003
  %v1005 = vlaneseq
  %v1006 = vshrl.u32 %v1005, 7
  %v1007 = vsub.s32 %v1004, %v1006
  %v1008 = vrot.slane %v1000, %v1007
  %v1010 = vunpack.c.l.s4 1934713408
  %v1011 = vunpack.c.0.s8 %v1010
  %v1012 = vlaneseq
  %v1013 = vshrl.u32 %v1012, 7
  %v1014 = vsub.s32 %v1011, %v1013
  %v1015 = vrot.slane %v1001, %v1014
  %v1016 = vcombine.low %v960, %v992
  %v1017 = vcombine.high %v960, %v992
  %v1018 = vcombine.low %v967, %v999
  %v1019 = vcombine.high %v967, %v999
  %v1020 = vcombine.low %v976, %v1008
  %v1021 = vcombine.high %v976, %v1008
  %v1022 = vcombine.low %v983, %v1015
  %v1023 = vcombine.high %v983, %v1015
  %v1024 = vlaneseq
  %v1025 = vshrl.u32 %v1024, 7
  %v1026 = vlaneseq
  %v1027 = vand.u32 %v1026, 127
  %vm1028 = vcmp.eq.s32.totalorder %v1025, %v1027
  %vm1029 = vcmp.gt.s32.totalorder %v1025, %v1027
  %vm1030 = vcmp.lt.s32.totalorder %v1025, %v1027
  %v1031 = vlaneseq
  %v1032 = vshrl.u32 %v1031, 7
  %v1033 = vsub.s32 0, %v1032
  %v1034 = vrot.slane %v345, %v1033
  %s1036 = sor.u32 256, 8
  %1037 = vbcast.lane.b32.xlu0 %v1034, %s1036
  %v1038 = vpop.permute.xlu0 %1037
  %v1039 = vlaneseq
  %v1040 = vshrl.u32 %v1039, 7
  %v1041 = vsub.s32 1, %v1040
  %v1042 = vrot.slane %v345, %v1041
  %s1044 = sor.u32 256, 8
  %1045 = vbcast.lane.b32.xlu0 %v1042, %s1044
  %v1046 = vpop.permute.xlu0 %1045
  %v1047 = vlaneseq
  %v1048 = vshrl.u32 %v1047, 7
  %v1049 = vsub.s32 2, %v1048
  %v1050 = vrot.slane %v345, %v1049
  %s1052 = sor.u32 256, 8
  %1053 = vbcast.lane.b32.xlu0 %v1050, %s1052
  %v1054 = vpop.permute.xlu0 %1053
  %v1055 = vlaneseq
  %v1056 = vshrl.u32 %v1055, 7
  %v1057 = vsub.s32 3, %v1056
  %v1058 = vrot.slane %v345, %v1057
  %s1060 = sor.u32 256, 8
  %1061 = vbcast.lane.b32.xlu0 %v1058, %s1060
  %v1062 = vpop.permute.xlu0 %1061
  %v1063 = vlaneseq
  %v1064 = vshrl.u32 %v1063, 7
  %v1065 = vsub.s32 4, %v1064
  %v1066 = vrot.slane %v345, %v1065
  %s1068 = sor.u32 256, 8
  %1069 = vbcast.lane.b32.xlu0 %v1066, %s1068
  %v1070 = vpop.permute.xlu0 %1069
  %v1071 = vlaneseq
  %v1072 = vshrl.u32 %v1071, 7
  %v1073 = vsub.s32 5, %v1072
  %v1074 = vrot.slane %v345, %v1073
  %s1076 = sor.u32 256, 8
  %1077 = vbcast.lane.b32.xlu0 %v1074, %s1076
  %v1078 = vpop.permute.xlu0 %1077
  %v1079 = vlaneseq
  %v1080 = vshrl.u32 %v1079, 7
  %v1081 = vsub.s32 6, %v1080
  %v1082 = vrot.slane %v345, %v1081
  %s1084 = sor.u32 256, 8
  %1085 = vbcast.lane.b32.xlu0 %v1082, %s1084
  %v1086 = vpop.permute.xlu0 %1085
  %v1087 = vlaneseq
  %v1088 = vshrl.u32 %v1087, 7
  %v1089 = vsub.s32 7, %v1088
  %v1090 = vrot.slane %v345, %v1089
  %s1092 = sor.u32 256, 8
  %1093 = vbcast.lane.b32.xlu0 %v1090, %s1092
  %v1094 = vpop.permute.xlu0 %1093
  %v1095 = vlaneseq
  %v1096 = vshrl.u32 %v1095, 7
  %v1097 = vsub.s32 0, %v1096
  %v1098 = vrot.slane %v347, %v1097
  %s1100 = sor.u32 256, 8
  %1101 = vbcast.lane.b32.xlu0 %v1098, %s1100
  %v1102 = vpop.permute.xlu0 %1101
  %v1103 = vlaneseq
  %v1104 = vshrl.u32 %v1103, 7
  %v1105 = vsub.s32 1, %v1104
  %v1106 = vrot.slane %v347, %v1105
  %s1108 = sor.u32 256, 8
  %1109 = vbcast.lane.b32.xlu0 %v1106, %s1108
  %v1110 = vpop.permute.xlu0 %1109
  %v1111 = vlaneseq
  %v1112 = vshrl.u32 %v1111, 7
  %v1113 = vsub.s32 2, %v1112
  %v1114 = vrot.slane %v347, %v1113
  %s1116 = sor.u32 256, 8
  %1117 = vbcast.lane.b32.xlu0 %v1114, %s1116
  %v1118 = vpop.permute.xlu0 %1117
  %v1119 = vlaneseq
  %v1120 = vshrl.u32 %v1119, 7
  %v1121 = vsub.s32 3, %v1120
  %v1122 = vrot.slane %v347, %v1121
  %s1124 = sor.u32 256, 8
  %1125 = vbcast.lane.b32.xlu0 %v1122, %s1124
  %v1126 = vpop.permute.xlu0 %1125
  %v1127 = vlaneseq
  %v1128 = vshrl.u32 %v1127, 7
  %v1129 = vsub.s32 4, %v1128
  %v1130 = vrot.slane %v347, %v1129
  %s1132 = sor.u32 256, 8
  %1133 = vbcast.lane.b32.xlu0 %v1130, %s1132
  %v1134 = vpop.permute.xlu0 %1133
  %v1135 = vlaneseq
  %v1136 = vshrl.u32 %v1135, 7
  %v1137 = vsub.s32 5, %v1136
  %v1138 = vrot.slane %v347, %v1137
  %s1140 = sor.u32 256, 8
  %1141 = vbcast.lane.b32.xlu0 %v1138, %s1140
  %v1142 = vpop.permute.xlu0 %1141
  %v1143 = vlaneseq
  %v1144 = vshrl.u32 %v1143, 7
  %v1145 = vsub.s32 6, %v1144
  %v1146 = vrot.slane %v347, %v1145
  %s1148 = sor.u32 256, 8
  %1149 = vbcast.lane.b32.xlu0 %v1146, %s1148
  %v1150 = vpop.permute.xlu0 %1149
  %v1151 = vlaneseq
  %v1152 = vshrl.u32 %v1151, 7
  %v1153 = vsub.s32 7, %v1152
  %v1154 = vrot.slane %v347, %v1153
  %s1156 = sor.u32 256, 8
  %1157 = vbcast.lane.b32.xlu0 %v1154, %s1156
  %v1158 = vpop.permute.xlu0 %1157
  %v1159 = vsel %vm1029, 1, 0
  %vm1160 = vcmp.eq.s32.totalorder %v1159, 1
  %v1161 = vsel %vm1160, %v550, 0.0
  %v1162 = vsel %vm1160, %v551, 0.0
  %v1163 = vsel %vm1160, %v552, 0.0
  %v1164 = vsel %vm1160, %v553, 0.0
  %v1165 = vsel %vm1160, %v554, 0.0
  %v1166 = vsel %vm1160, %v555, 0.0
  %v1167 = vsel %vm1160, %v556, 0.0
  %v1168 = vsel %vm1160, %v557, 0.0
  %v1169 = vsel %vm1160, %v686, 0.0
  %v1170 = vsel %vm1160, %v687, 0.0
  %v1171 = vsel %vm1160, %v688, 0.0
  %v1172 = vsel %vm1160, %v689, 0.0
  %v1173 = vsel %vm1160, %v690, 0.0
  %v1174 = vsel %vm1160, %v691, 0.0
  %v1175 = vsel %vm1160, %v692, 0.0
  %v1176 = vsel %vm1160, %v693, 0.0
  %v1177 = vsel %vm1028, 1, 0
  %vm1178 = vcmp.eq.s32.totalorder %v1177, 1
  %v1179 = vsel %vm1178, %v1038, %v1161
  %v1180 = vsel %vm1178, %v1046, %v1162
  %v1181 = vsel %vm1178, %v1054, %v1163
  %v1182 = vsel %vm1178, %v1062, %v1164
  %v1183 = vsel %vm1178, %v1070, %v1165
  %v1184 = vsel %vm1178, %v1078, %v1166
  %v1185 = vsel %vm1178, %v1086, %v1167
  %v1186 = vsel %vm1178, %v1094, %v1168
  %v1187 = vsel %vm1178, %v1102, %v1169
  %v1188 = vsel %vm1178, %v1110, %v1170
  %v1189 = vsel %vm1178, %v1118, %v1171
  %v1190 = vsel %vm1178, %v1126, %v1172
  %v1191 = vsel %vm1178, %v1134, %v1173
  %v1192 = vsel %vm1178, %v1142, %v1174
  %v1193 = vsel %vm1178, %v1150, %v1175
  %v1194 = vsel %vm1178, %v1158, %v1176
  %v1195 = vsel %vm1030, 1, 0
  %vm1196 = vcmp.eq.s32.totalorder %v1195, 1
  %v1197 = vsel %vm1196, %v880, 0.0
  %v1198 = vsel %vm1196, %v881, 0.0
  %v1199 = vsel %vm1196, %v882, 0.0
  %v1200 = vsel %vm1196, %v883, 0.0
  %v1201 = vsel %vm1196, %v884, 0.0
  %v1202 = vsel %vm1196, %v885, 0.0
  %v1203 = vsel %vm1196, %v886, 0.0
  %v1204 = vsel %vm1196, %v887, 0.0
  %v1205 = vsel %vm1196, %v1016, 0.0
  %v1206 = vsel %vm1196, %v1017, 0.0
  %v1207 = vsel %vm1196, %v1018, 0.0
  %v1208 = vsel %vm1196, %v1019, 0.0
  %v1209 = vsel %vm1196, %v1020, 0.0
  %v1210 = vsel %vm1196, %v1021, 0.0
  %v1211 = vsel %vm1196, %v1022, 0.0
  %v1212 = vsel %vm1196, %v1023, 0.0
  %v1213 = vsel %vm1178, %v1038, %v1197
  %v1214 = vsel %vm1178, %v1046, %v1198
  %v1215 = vsel %vm1178, %v1054, %v1199
  %v1216 = vsel %vm1178, %v1062, %v1200
  %v1217 = vsel %vm1178, %v1070, %v1201
  %v1218 = vsel %vm1178, %v1078, %v1202
  %v1219 = vsel %vm1178, %v1086, %v1203
  %v1220 = vsel %vm1178, %v1094, %v1204
  %v1221 = vsel %vm1178, %v1102, %v1205
  %v1222 = vsel %vm1178, %v1110, %v1206
  %v1223 = vsel %vm1178, %v1118, %v1207
  %v1224 = vsel %vm1178, %v1126, %v1208
  %v1225 = vsel %vm1178, %v1134, %v1209
  %v1226 = vsel %vm1178, %v1142, %v1210
  %v1227 = vsel %vm1178, %v1150, %v1211
  %v1228 = vsel %vm1178, %v1158, %v1212
  %v1229 = vsel %vm1028, 1e-06, 0.0
  %1231 = vset.pattern.permute.xlu0 0
  %1232 = vperm.xlu0 %1231, %v1179
  %v1233 = vpop.permute.xlu0 %1232
  %1236 = vset.pattern.permute.xlu0 0
  %1237 = vperm.xlu0 %1236, %v1180
  %v1238 = vpop.permute.xlu0 %1237
  %1241 = vset.pattern.permute.xlu0 0
  %1242 = vperm.xlu0 %1241, %v1181
  %v1243 = vpop.permute.xlu0 %1242
  %1246 = vset.pattern.permute.xlu0 0
  %1247 = vperm.xlu0 %1246, %v1182
  %v1248 = vpop.permute.xlu0 %1247
  %1251 = vset.pattern.permute.xlu0 0
  %1252 = vperm.xlu0 %1251, %v1183
  %v1253 = vpop.permute.xlu0 %1252
  %1256 = vset.pattern.permute.xlu0 0
  %1257 = vperm.xlu0 %1256, %v1184
  %v1258 = vpop.permute.xlu0 %1257
  %1261 = vset.pattern.permute.xlu0 0
  %1262 = vperm.xlu0 %1261, %v1185
  %v1263 = vpop.permute.xlu0 %1262
  %1266 = vset.pattern.permute.xlu0 0
  %1267 = vperm.xlu0 %1266, %v1186
  %v1268 = vpop.permute.xlu0 %1267
  %1271 = vset.pattern.permute.xlu0 0
  %1272 = vperm.xlu0 %1271, %v1187
  %v1273 = vpop.permute.xlu0 %1272
  %1276 = vset.pattern.permute.xlu0 0
  %1277 = vperm.xlu0 %1276, %v1188
  %v1278 = vpop.permute.xlu0 %1277
  %1281 = vset.pattern.permute.xlu0 0
  %1282 = vperm.xlu0 %1281, %v1189
  %v1283 = vpop.permute.xlu0 %1282
  %1286 = vset.pattern.permute.xlu0 0
  %1287 = vperm.xlu0 %1286, %v1190
  %v1288 = vpop.permute.xlu0 %1287
  %1291 = vset.pattern.permute.xlu0 0
  %1292 = vperm.xlu0 %1291, %v1191
  %v1293 = vpop.permute.xlu0 %1292
  %1296 = vset.pattern.permute.xlu0 0
  %1297 = vperm.xlu0 %1296, %v1192
  %v1298 = vpop.permute.xlu0 %1297
  %1301 = vset.pattern.permute.xlu0 0
  %1302 = vperm.xlu0 %1301, %v1193
  %v1303 = vpop.permute.xlu0 %1302
  %1306 = vset.pattern.permute.xlu0 0
  %1307 = vperm.xlu0 %1306, %v1194
  %v1308 = vpop.permute.xlu0 %1307
  %v1310 = vlaneseq
  %v1311 = vshrl.u32 %v1310, 7
  %v1312 = vsub.s32 0, %v1311
  %v1313 = vrot.slane %v1213, %v1312
  %v1314 = vlaneseq
  %v1315 = vshrl.u32 %v1314, 7
  %v1316 = vsub.s32 0, %v1315
  %v1317 = vrot.slane %v1214, %v1316
  %v1318 = vlaneseq
  %v1319 = vshrl.u32 %v1318, 7
  %v1320 = vsub.s32 0, %v1319
  %v1321 = vrot.slane %v1215, %v1320
  %v1322 = vlaneseq
  %v1323 = vshrl.u32 %v1322, 7
  %v1324 = vsub.s32 0, %v1323
  %v1325 = vrot.slane %v1216, %v1324
  %v1326 = vlaneseq
  %v1327 = vshrl.u32 %v1326, 7
  %v1328 = vsub.s32 0, %v1327
  %v1329 = vrot.slane %v1217, %v1328
  %v1330 = vlaneseq
  %v1331 = vshrl.u32 %v1330, 7
  %v1332 = vsub.s32 0, %v1331
  %v1333 = vrot.slane %v1218, %v1332
  %v1334 = vlaneseq
  %v1335 = vshrl.u32 %v1334, 7
  %v1336 = vsub.s32 0, %v1335
  %v1337 = vrot.slane %v1219, %v1336
  %v1338 = vlaneseq
  %v1339 = vshrl.u32 %v1338, 7
  %v1340 = vsub.s32 0, %v1339
  %v1341 = vrot.slane %v1220, %v1340
  %v1342 = vlaneseq
  %v1343 = vshrl.u32 %v1342, 7
  %v1344 = vsub.s32 0, %v1343
  %v1345 = vrot.slane %v1221, %v1344
  %v1346 = vlaneseq
  %v1347 = vshrl.u32 %v1346, 7
  %v1348 = vsub.s32 0, %v1347
  %v1349 = vrot.slane %v1222, %v1348
  %v1350 = vlaneseq
  %v1351 = vshrl.u32 %v1350, 7
  %v1352 = vsub.s32 0, %v1351
  %v1353 = vrot.slane %v1223, %v1352
  %v1354 = vlaneseq
  %v1355 = vshrl.u32 %v1354, 7
  %v1356 = vsub.s32 0, %v1355
  %v1357 = vrot.slane %v1224, %v1356
  %v1358 = vlaneseq
  %v1359 = vshrl.u32 %v1358, 7
  %v1360 = vsub.s32 0, %v1359
  %v1361 = vrot.slane %v1225, %v1360
  %v1362 = vlaneseq
  %v1363 = vshrl.u32 %v1362, 7
  %v1364 = vsub.s32 0, %v1363
  %v1365 = vrot.slane %v1226, %v1364
  %v1366 = vlaneseq
  %v1367 = vshrl.u32 %v1366, 7
  %v1368 = vsub.s32 0, %v1367
  %v1369 = vrot.slane %v1227, %v1368
  %v1370 = vlaneseq
  %v1371 = vshrl.u32 %v1370, 7
  %v1372 = vsub.s32 0, %v1371
  %v1373 = vrot.slane %v1228, %v1372
  %v1374 = vmul.f32 %v1233, %v1313
  %v1375 = vmul.f32 %v1238, %v1317
  %v1376 = vmul.f32 %v1243, %v1321
  %v1377 = vmul.f32 %v1248, %v1325
  %v1378 = vmul.f32 %v1253, %v1329
  %v1379 = vmul.f32 %v1258, %v1333
  %v1380 = vmul.f32 %v1263, %v1337
  %v1381 = vmul.f32 %v1268, %v1341
  %v1382 = vmul.f32 %v1273, %v1345
  %v1383 = vmul.f32 %v1278, %v1349
  %v1384 = vmul.f32 %v1283, %v1353
  %v1385 = vmul.f32 %v1288, %v1357
  %v1386 = vmul.f32 %v1293, %v1361
  %v1387 = vmul.f32 %v1298, %v1365
  %v1388 = vmul.f32 %v1303, %v1369
  %v1389 = vmul.f32 %v1308, %v1373
  %v1390 = vadd.f32 %v1229, %v1374
  %v1391 = vadd.f32 %v1229, %v1375
  %v1392 = vadd.f32 %v1229, %v1376
  %v1393 = vadd.f32 %v1229, %v1377
  %v1394 = vadd.f32 %v1229, %v1378
  %v1395 = vadd.f32 %v1229, %v1379
  %v1396 = vadd.f32 %v1229, %v1380
  %v1397 = vadd.f32 %v1229, %v1381
  %v1398 = vadd.f32 %v1229, %v1382
  %v1399 = vadd.f32 %v1229, %v1383
  %v1400 = vadd.f32 %v1229, %v1384
  %v1401 = vadd.f32 %v1229, %v1385
  %v1402 = vadd.f32 %v1229, %v1386
  %v1403 = vadd.f32 %v1229, %v1387
  %v1404 = vadd.f32 %v1229, %v1388
  %v1405 = vadd.f32 %v1229, %v1389
  %1406 = vset.pattern.permute.xlu0 1
  %1407 = vperm.xlu0 %1406, %v1179
  %v1408 = vpop.permute.xlu0 %1407
  %1410 = vset.pattern.permute.xlu0 1
  %1411 = vperm.xlu0 %1410, %v1180
  %v1412 = vpop.permute.xlu0 %1411
  %1414 = vset.pattern.permute.xlu0 1
  %1415 = vperm.xlu0 %1414, %v1181
  %v1416 = vpop.permute.xlu0 %1415
  %1418 = vset.pattern.permute.xlu0 1
  %1419 = vperm.xlu0 %1418, %v1182
  %v1420 = vpop.permute.xlu0 %1419
  %1422 = vset.pattern.permute.xlu0 1
  %1423 = vperm.xlu0 %1422, %v1183
  %v1424 = vpop.permute.xlu0 %1423
  %1426 = vset.pattern.permute.xlu0 1
  %1427 = vperm.xlu0 %1426, %v1184
  %v1428 = vpop.permute.xlu0 %1427
  %1430 = vset.pattern.permute.xlu0 1
  %1431 = vperm.xlu0 %1430, %v1185
  %v1432 = vpop.permute.xlu0 %1431
  %1434 = vset.pattern.permute.xlu0 1
  %1435 = vperm.xlu0 %1434, %v1186
  %v1436 = vpop.permute.xlu0 %1435
  %1438 = vset.pattern.permute.xlu0 1
  %1439 = vperm.xlu0 %1438, %v1187
  %v1440 = vpop.permute.xlu0 %1439
  %1442 = vset.pattern.permute.xlu0 1
  %1443 = vperm.xlu0 %1442, %v1188
  %v1444 = vpop.permute.xlu0 %1443
  %1446 = vset.pattern.permute.xlu0 1
  %1447 = vperm.xlu0 %1446, %v1189
  %v1448 = vpop.permute.xlu0 %1447
  %1450 = vset.pattern.permute.xlu0 1
  %1451 = vperm.xlu0 %1450, %v1190
  %v1452 = vpop.permute.xlu0 %1451
  %1454 = vset.pattern.permute.xlu0 1
  %1455 = vperm.xlu0 %1454, %v1191
  %v1456 = vpop.permute.xlu0 %1455
  %1458 = vset.pattern.permute.xlu0 1
  %1459 = vperm.xlu0 %1458, %v1192
  %v1460 = vpop.permute.xlu0 %1459
  %1462 = vset.pattern.permute.xlu0 1
  %1463 = vperm.xlu0 %1462, %v1193
  %v1464 = vpop.permute.xlu0 %1463
  %1466 = vset.pattern.permute.xlu0 1
  %1467 = vperm.xlu0 %1466, %v1194
  %v1468 = vpop.permute.xlu0 %1467
  %v1470 = vlaneseq
  %v1471 = vshrl.u32 %v1470, 7
  %v1472 = vsub.s32 1, %v1471
  %v1473 = vrot.slane %v1213, %v1472
  %v1474 = vlaneseq
  %v1475 = vshrl.u32 %v1474, 7
  %v1476 = vsub.s32 1, %v1475
  %v1477 = vrot.slane %v1214, %v1476
  %v1478 = vlaneseq
  %v1479 = vshrl.u32 %v1478, 7
  %v1480 = vsub.s32 1, %v1479
  %v1481 = vrot.slane %v1215, %v1480
  %v1482 = vlaneseq
  %v1483 = vshrl.u32 %v1482, 7
  %v1484 = vsub.s32 1, %v1483
  %v1485 = vrot.slane %v1216, %v1484
  %v1486 = vlaneseq
  %v1487 = vshrl.u32 %v1486, 7
  %v1488 = vsub.s32 1, %v1487
  %v1489 = vrot.slane %v1217, %v1488
  %v1490 = vlaneseq
  %v1491 = vshrl.u32 %v1490, 7
  %v1492 = vsub.s32 1, %v1491
  %v1493 = vrot.slane %v1218, %v1492
  %v1494 = vlaneseq
  %v1495 = vshrl.u32 %v1494, 7
  %v1496 = vsub.s32 1, %v1495
  %v1497 = vrot.slane %v1219, %v1496
  %v1498 = vlaneseq
  %v1499 = vshrl.u32 %v1498, 7
  %v1500 = vsub.s32 1, %v1499
  %v1501 = vrot.slane %v1220, %v1500
  %v1502 = vlaneseq
  %v1503 = vshrl.u32 %v1502, 7
  %v1504 = vsub.s32 1, %v1503
  %v1505 = vrot.slane %v1221, %v1504
  %v1506 = vlaneseq
  %v1507 = vshrl.u32 %v1506, 7
  %v1508 = vsub.s32 1, %v1507
  %v1509 = vrot.slane %v1222, %v1508
  %v1510 = vlaneseq
  %v1511 = vshrl.u32 %v1510, 7
  %v1512 = vsub.s32 1, %v1511
  %v1513 = vrot.slane %v1223, %v1512
  %v1514 = vlaneseq
  %v1515 = vshrl.u32 %v1514, 7
  %v1516 = vsub.s32 1, %v1515
  %v1517 = vrot.slane %v1224, %v1516
  %v1518 = vlaneseq
  %v1519 = vshrl.u32 %v1518, 7
  %v1520 = vsub.s32 1, %v1519
  %v1521 = vrot.slane %v1225, %v1520
  %v1522 = vlaneseq
  %v1523 = vshrl.u32 %v1522, 7
  %v1524 = vsub.s32 1, %v1523
  %v1525 = vrot.slane %v1226, %v1524
  %v1526 = vlaneseq
  %v1527 = vshrl.u32 %v1526, 7
  %v1528 = vsub.s32 1, %v1527
  %v1529 = vrot.slane %v1227, %v1528
  %v1530 = vlaneseq
  %v1531 = vshrl.u32 %v1530, 7
  %v1532 = vsub.s32 1, %v1531
  %v1533 = vrot.slane %v1228, %v1532
  %v1534 = vmul.f32 %v1408, %v1473
  %v1535 = vmul.f32 %v1412, %v1477
  %v1536 = vmul.f32 %v1416, %v1481
  %v1537 = vmul.f32 %v1420, %v1485
  %v1538 = vmul.f32 %v1424, %v1489
  %v1539 = vmul.f32 %v1428, %v1493
  %v1540 = vmul.f32 %v1432, %v1497
  %v1541 = vmul.f32 %v1436, %v1501
  %v1542 = vmul.f32 %v1440, %v1505
  %v1543 = vmul.f32 %v1444, %v1509
  %v1544 = vmul.f32 %v1448, %v1513
  %v1545 = vmul.f32 %v1452, %v1517
  %v1546 = vmul.f32 %v1456, %v1521
  %v1547 = vmul.f32 %v1460, %v1525
  %v1548 = vmul.f32 %v1464, %v1529
  %v1549 = vmul.f32 %v1468, %v1533
  %v1550 = vadd.f32 %v1390, %v1534
  %v1551 = vadd.f32 %v1391, %v1535
  %v1552 = vadd.f32 %v1392, %v1536
  %v1553 = vadd.f32 %v1393, %v1537
  %v1554 = vadd.f32 %v1394, %v1538
  %v1555 = vadd.f32 %v1395, %v1539
  %v1556 = vadd.f32 %v1396, %v1540
  %v1557 = vadd.f32 %v1397, %v1541
  %v1558 = vadd.f32 %v1398, %v1542
  %v1559 = vadd.f32 %v1399, %v1543
  %v1560 = vadd.f32 %v1400, %v1544
  %v1561 = vadd.f32 %v1401, %v1545
  %v1562 = vadd.f32 %v1402, %v1546
  %v1563 = vadd.f32 %v1403, %v1547
  %v1564 = vadd.f32 %v1404, %v1548
  %v1565 = vadd.f32 %v1405, %v1549
  %1566 = vset.pattern.permute.xlu0 2
  %1567 = vperm.xlu0 %1566, %v1179
  %v1568 = vpop.permute.xlu0 %1567
  %1570 = vset.pattern.permute.xlu0 2
  %1571 = vperm.xlu0 %1570, %v1180
  %v1572 = vpop.permute.xlu0 %1571
  %1574 = vset.pattern.permute.xlu0 2
  %1575 = vperm.xlu0 %1574, %v1181
  %v1576 = vpop.permute.xlu0 %1575
  %1578 = vset.pattern.permute.xlu0 2
  %1579 = vperm.xlu0 %1578, %v1182
  %v1580 = vpop.permute.xlu0 %1579
  %1582 = vset.pattern.permute.xlu0 2
  %1583 = vperm.xlu0 %1582, %v1183
  %v1584 = vpop.permute.xlu0 %1583
  %1586 = vset.pattern.permute.xlu0 2
  %1587 = vperm.xlu0 %1586, %v1184
  %v1588 = vpop.permute.xlu0 %1587
  %1590 = vset.pattern.permute.xlu0 2
  %1591 = vperm.xlu0 %1590, %v1185
  %v1592 = vpop.permute.xlu0 %1591
  %1594 = vset.pattern.permute.xlu0 2
  %1595 = vperm.xlu0 %1594, %v1186
  %v1596 = vpop.permute.xlu0 %1595
  %1598 = vset.pattern.permute.xlu0 2
  %1599 = vperm.xlu0 %1598, %v1187
  %v1600 = vpop.permute.xlu0 %1599
  %1602 = vset.pattern.permute.xlu0 2
  %1603 = vperm.xlu0 %1602, %v1188
  %v1604 = vpop.permute.xlu0 %1603
  %1606 = vset.pattern.permute.xlu0 2
  %1607 = vperm.xlu0 %1606, %v1189
  %v1608 = vpop.permute.xlu0 %1607
  %1610 = vset.pattern.permute.xlu0 2
  %1611 = vperm.xlu0 %1610, %v1190
  %v1612 = vpop.permute.xlu0 %1611
  %1614 = vset.pattern.permute.xlu0 2
  %1615 = vperm.xlu0 %1614, %v1191
  %v1616 = vpop.permute.xlu0 %1615
  %1618 = vset.pattern.permute.xlu0 2
  %1619 = vperm.xlu0 %1618, %v1192
  %v1620 = vpop.permute.xlu0 %1619
  %1622 = vset.pattern.permute.xlu0 2
  %1623 = vperm.xlu0 %1622, %v1193
  %v1624 = vpop.permute.xlu0 %1623
  %1626 = vset.pattern.permute.xlu0 2
  %1627 = vperm.xlu0 %1626, %v1194
  %v1628 = vpop.permute.xlu0 %1627
  %v1630 = vlaneseq
  %v1631 = vshrl.u32 %v1630, 7
  %v1632 = vsub.s32 2, %v1631
  %v1633 = vrot.slane %v1213, %v1632
  %v1634 = vlaneseq
  %v1635 = vshrl.u32 %v1634, 7
  %v1636 = vsub.s32 2, %v1635
  %v1637 = vrot.slane %v1214, %v1636
  %v1638 = vlaneseq
  %v1639 = vshrl.u32 %v1638, 7
  %v1640 = vsub.s32 2, %v1639
  %v1641 = vrot.slane %v1215, %v1640
  %v1642 = vlaneseq
  %v1643 = vshrl.u32 %v1642, 7
  %v1644 = vsub.s32 2, %v1643
  %v1645 = vrot.slane %v1216, %v1644
  %v1646 = vlaneseq
  %v1647 = vshrl.u32 %v1646, 7
  %v1648 = vsub.s32 2, %v1647
  %v1649 = vrot.slane %v1217, %v1648
  %v1650 = vlaneseq
  %v1651 = vshrl.u32 %v1650, 7
  %v1652 = vsub.s32 2, %v1651
  %v1653 = vrot.slane %v1218, %v1652
  %v1654 = vlaneseq
  %v1655 = vshrl.u32 %v1654, 7
  %v1656 = vsub.s32 2, %v1655
  %v1657 = vrot.slane %v1219, %v1656
  %v1658 = vlaneseq
  %v1659 = vshrl.u32 %v1658, 7
  %v1660 = vsub.s32 2, %v1659
  %v1661 = vrot.slane %v1220, %v1660
  %v1662 = vlaneseq
  %v1663 = vshrl.u32 %v1662, 7
  %v1664 = vsub.s32 2, %v1663
  %v1665 = vrot.slane %v1221, %v1664
  %v1666 = vlaneseq
  %v1667 = vshrl.u32 %v1666, 7
  %v1668 = vsub.s32 2, %v1667
  %v1669 = vrot.slane %v1222, %v1668
  %v1670 = vlaneseq
  %v1671 = vshrl.u32 %v1670, 7
  %v1672 = vsub.s32 2, %v1671
  %v1673 = vrot.slane %v1223, %v1672
  %v1674 = vlaneseq
  %v1675 = vshrl.u32 %v1674, 7
  %v1676 = vsub.s32 2, %v1675
  %v1677 = vrot.slane %v1224, %v1676
  %v1678 = vlaneseq
  %v1679 = vshrl.u32 %v1678, 7
  %v1680 = vsub.s32 2, %v1679
  %v1681 = vrot.slane %v1225, %v1680
  %v1682 = vlaneseq
  %v1683 = vshrl.u32 %v1682, 7
  %v1684 = vsub.s32 2, %v1683
  %v1685 = vrot.slane %v1226, %v1684
  %v1686 = vlaneseq
  %v1687 = vshrl.u32 %v1686, 7
  %v1688 = vsub.s32 2, %v1687
  %v1689 = vrot.slane %v1227, %v1688
  %v1690 = vlaneseq
  %v1691 = vshrl.u32 %v1690, 7
  %v1692 = vsub.s32 2, %v1691
  %v1693 = vrot.slane %v1228, %v1692
  %v1694 = vmul.f32 %v1568, %v1633
  %v1695 = vmul.f32 %v1572, %v1637
  %v1696 = vmul.f32 %v1576, %v1641
  %v1697 = vmul.f32 %v1580, %v1645
  %v1698 = vmul.f32 %v1584, %v1649
  %v1699 = vmul.f32 %v1588, %v1653
  %v1700 = vmul.f32 %v1592, %v1657
  %v1701 = vmul.f32 %v1596, %v1661
  %v1702 = vmul.f32 %v1600, %v1665
  %v1703 = vmul.f32 %v1604, %v1669
  %v1704 = vmul.f32 %v1608, %v1673
  %v1705 = vmul.f32 %v1612, %v1677
  %v1706 = vmul.f32 %v1616, %v1681
  %v1707 = vmul.f32 %v1620, %v1685
  %v1708 = vmul.f32 %v1624, %v1689
  %v1709 = vmul.f32 %v1628, %v1693
  %v1710 = vadd.f32 %v1550, %v1694
  %v1711 = vadd.f32 %v1551, %v1695
  %v1712 = vadd.f32 %v1552, %v1696
  %v1713 = vadd.f32 %v1553, %v1697
  %v1714 = vadd.f32 %v1554, %v1698
  %v1715 = vadd.f32 %v1555, %v1699
  %v1716 = vadd.f32 %v1556, %v1700
  %v1717 = vadd.f32 %v1557, %v1701
  %v1718 = vadd.f32 %v1558, %v1702
  %v1719 = vadd.f32 %v1559, %v1703
  %v1720 = vadd.f32 %v1560, %v1704
  %v1721 = vadd.f32 %v1561, %v1705
  %v1722 = vadd.f32 %v1562, %v1706
  %v1723 = vadd.f32 %v1563, %v1707
  %v1724 = vadd.f32 %v1564, %v1708
  %v1725 = vadd.f32 %v1565, %v1709
  %1726 = vset.pattern.permute.xlu0 3
  %1727 = vperm.xlu0 %1726, %v1179
  %v1728 = vpop.permute.xlu0 %1727
  %1730 = vset.pattern.permute.xlu0 3
  %1731 = vperm.xlu0 %1730, %v1180
  %v1732 = vpop.permute.xlu0 %1731
  %1734 = vset.pattern.permute.xlu0 3
  %1735 = vperm.xlu0 %1734, %v1181
  %v1736 = vpop.permute.xlu0 %1735
  %1738 = vset.pattern.permute.xlu0 3
  %1739 = vperm.xlu0 %1738, %v1182
  %v1740 = vpop.permute.xlu0 %1739
  %1742 = vset.pattern.permute.xlu0 3
  %1743 = vperm.xlu0 %1742, %v1183
  %v1744 = vpop.permute.xlu0 %1743
  %1746 = vset.pattern.permute.xlu0 3
  %1747 = vperm.xlu0 %1746, %v1184
  %v1748 = vpop.permute.xlu0 %1747
  %1750 = vset.pattern.permute.xlu0 3
  %1751 = vperm.xlu0 %1750, %v1185
  %v1752 = vpop.permute.xlu0 %1751
  %1754 = vset.pattern.permute.xlu0 3
  %1755 = vperm.xlu0 %1754, %v1186
  %v1756 = vpop.permute.xlu0 %1755
  %1758 = vset.pattern.permute.xlu0 3
  %1759 = vperm.xlu0 %1758, %v1187
  %v1760 = vpop.permute.xlu0 %1759
  %1762 = vset.pattern.permute.xlu0 3
  %1763 = vperm.xlu0 %1762, %v1188
  %v1764 = vpop.permute.xlu0 %1763
  %1766 = vset.pattern.permute.xlu0 3
  %1767 = vperm.xlu0 %1766, %v1189
  %v1768 = vpop.permute.xlu0 %1767
  %1770 = vset.pattern.permute.xlu0 3
  %1771 = vperm.xlu0 %1770, %v1190
  %v1772 = vpop.permute.xlu0 %1771
  %1774 = vset.pattern.permute.xlu0 3
  %1775 = vperm.xlu0 %1774, %v1191
  %v1776 = vpop.permute.xlu0 %1775
  %1778 = vset.pattern.permute.xlu0 3
  %1779 = vperm.xlu0 %1778, %v1192
  %v1780 = vpop.permute.xlu0 %1779
  %1782 = vset.pattern.permute.xlu0 3
  %1783 = vperm.xlu0 %1782, %v1193
  %v1784 = vpop.permute.xlu0 %1783
  %1786 = vset.pattern.permute.xlu0 3
  %1787 = vperm.xlu0 %1786, %v1194
  %v1788 = vpop.permute.xlu0 %1787
  %v1790 = vlaneseq
  %v1791 = vshrl.u32 %v1790, 7
  %v1792 = vsub.s32 3, %v1791
  %v1793 = vrot.slane %v1213, %v1792
  %v1794 = vlaneseq
  %v1795 = vshrl.u32 %v1794, 7
  %v1796 = vsub.s32 3, %v1795
  %v1797 = vrot.slane %v1214, %v1796
  %v1798 = vlaneseq
  %v1799 = vshrl.u32 %v1798, 7
  %v1800 = vsub.s32 3, %v1799
  %v1801 = vrot.slane %v1215, %v1800
  %v1802 = vlaneseq
  %v1803 = vshrl.u32 %v1802, 7
  %v1804 = vsub.s32 3, %v1803
  %v1805 = vrot.slane %v1216, %v1804
  %v1806 = vlaneseq
  %v1807 = vshrl.u32 %v1806, 7
  %v1808 = vsub.s32 3, %v1807
  %v1809 = vrot.slane %v1217, %v1808
  %v1810 = vlaneseq
  %v1811 = vshrl.u32 %v1810, 7
  %v1812 = vsub.s32 3, %v1811
  %v1813 = vrot.slane %v1218, %v1812
  %v1814 = vlaneseq
  %v1815 = vshrl.u32 %v1814, 7
  %v1816 = vsub.s32 3, %v1815
  %v1817 = vrot.slane %v1219, %v1816
  %v1818 = vlaneseq
  %v1819 = vshrl.u32 %v1818, 7
  %v1820 = vsub.s32 3, %v1819
  %v1821 = vrot.slane %v1220, %v1820
  %v1822 = vlaneseq
  %v1823 = vshrl.u32 %v1822, 7
  %v1824 = vsub.s32 3, %v1823
  %v1825 = vrot.slane %v1221, %v1824
  %v1826 = vlaneseq
  %v1827 = vshrl.u32 %v1826, 7
  %v1828 = vsub.s32 3, %v1827
  %v1829 = vrot.slane %v1222, %v1828
  %v1830 = vlaneseq
  %v1831 = vshrl.u32 %v1830, 7
  %v1832 = vsub.s32 3, %v1831
  %v1833 = vrot.slane %v1223, %v1832
  %v1834 = vlaneseq
  %v1835 = vshrl.u32 %v1834, 7
  %v1836 = vsub.s32 3, %v1835
  %v1837 = vrot.slane %v1224, %v1836
  %v1838 = vlaneseq
  %v1839 = vshrl.u32 %v1838, 7
  %v1840 = vsub.s32 3, %v1839
  %v1841 = vrot.slane %v1225, %v1840
  %v1842 = vlaneseq
  %v1843 = vshrl.u32 %v1842, 7
  %v1844 = vsub.s32 3, %v1843
  %v1845 = vrot.slane %v1226, %v1844
  %v1846 = vlaneseq
  %v1847 = vshrl.u32 %v1846, 7
  %v1848 = vsub.s32 3, %v1847
  %v1849 = vrot.slane %v1227, %v1848
  %v1850 = vlaneseq
  %v1851 = vshrl.u32 %v1850, 7
  %v1852 = vsub.s32 3, %v1851
  %v1853 = vrot.slane %v1228, %v1852
  %v1854 = vmul.f32 %v1728, %v1793
  %v1855 = vmul.f32 %v1732, %v1797
  %v1856 = vmul.f32 %v1736, %v1801
  %v1857 = vmul.f32 %v1740, %v1805
  %v1858 = vmul.f32 %v1744, %v1809
  %v1859 = vmul.f32 %v1748, %v1813
  %v1860 = vmul.f32 %v1752, %v1817
  %v1861 = vmul.f32 %v1756, %v1821
  %v1862 = vmul.f32 %v1760, %v1825
  %v1863 = vmul.f32 %v1764, %v1829
  %v1864 = vmul.f32 %v1768, %v1833
  %v1865 = vmul.f32 %v1772, %v1837
  %v1866 = vmul.f32 %v1776, %v1841
  %v1867 = vmul.f32 %v1780, %v1845
  %v1868 = vmul.f32 %v1784, %v1849
  %v1869 = vmul.f32 %v1788, %v1853
  %v1870 = vadd.f32 %v1710, %v1854
  %v1871 = vadd.f32 %v1711, %v1855
  %v1872 = vadd.f32 %v1712, %v1856
  %v1873 = vadd.f32 %v1713, %v1857
  %v1874 = vadd.f32 %v1714, %v1858
  %v1875 = vadd.f32 %v1715, %v1859
  %v1876 = vadd.f32 %v1716, %v1860
  %v1877 = vadd.f32 %v1717, %v1861
  %v1878 = vadd.f32 %v1718, %v1862
  %v1879 = vadd.f32 %v1719, %v1863
  %v1880 = vadd.f32 %v1720, %v1864
  %v1881 = vadd.f32 %v1721, %v1865
  %v1882 = vadd.f32 %v1722, %v1866
  %v1883 = vadd.f32 %v1723, %v1867
  %v1884 = vadd.f32 %v1724, %v1868
  %v1885 = vadd.f32 %v1725, %v1869
  %1886 = vset.pattern.permute.xlu0 4
  %1887 = vperm.xlu0 %1886, %v1179
  %v1888 = vpop.permute.xlu0 %1887
  %1890 = vset.pattern.permute.xlu0 4
  %1891 = vperm.xlu0 %1890, %v1180
  %v1892 = vpop.permute.xlu0 %1891
  %1894 = vset.pattern.permute.xlu0 4
  %1895 = vperm.xlu0 %1894, %v1181
  %v1896 = vpop.permute.xlu0 %1895
  %1898 = vset.pattern.permute.xlu0 4
  %1899 = vperm.xlu0 %1898, %v1182
  %v1900 = vpop.permute.xlu0 %1899
  %1902 = vset.pattern.permute.xlu0 4
  %1903 = vperm.xlu0 %1902, %v1183
  %v1904 = vpop.permute.xlu0 %1903
  %1906 = vset.pattern.permute.xlu0 4
  %1907 = vperm.xlu0 %1906, %v1184
  %v1908 = vpop.permute.xlu0 %1907
  %1910 = vset.pattern.permute.xlu0 4
  %1911 = vperm.xlu0 %1910, %v1185
  %v1912 = vpop.permute.xlu0 %1911
  %1914 = vset.pattern.permute.xlu0 4
  %1915 = vperm.xlu0 %1914, %v1186
  %v1916 = vpop.permute.xlu0 %1915
  %1918 = vset.pattern.permute.xlu0 4
  %1919 = vperm.xlu0 %1918, %v1187
  %v1920 = vpop.permute.xlu0 %1919
  %1922 = vset.pattern.permute.xlu0 4
  %1923 = vperm.xlu0 %1922, %v1188
  %v1924 = vpop.permute.xlu0 %1923
  %1926 = vset.pattern.permute.xlu0 4
  %1927 = vperm.xlu0 %1926, %v1189
  %v1928 = vpop.permute.xlu0 %1927
  %1930 = vset.pattern.permute.xlu0 4
  %1931 = vperm.xlu0 %1930, %v1190
  %v1932 = vpop.permute.xlu0 %1931
  %1934 = vset.pattern.permute.xlu0 4
  %1935 = vperm.xlu0 %1934, %v1191
  %v1936 = vpop.permute.xlu0 %1935
  %1938 = vset.pattern.permute.xlu0 4
  %1939 = vperm.xlu0 %1938, %v1192
  %v1940 = vpop.permute.xlu0 %1939
  %1942 = vset.pattern.permute.xlu0 4
  %1943 = vperm.xlu0 %1942, %v1193
  %v1944 = vpop.permute.xlu0 %1943
  %1946 = vset.pattern.permute.xlu0 4
  %1947 = vperm.xlu0 %1946, %v1194
  %v1948 = vpop.permute.xlu0 %1947
  %v1950 = vlaneseq
  %v1951 = vshrl.u32 %v1950, 7
  %v1952 = vsub.s32 4, %v1951
  %v1953 = vrot.slane %v1213, %v1952
  %v1954 = vlaneseq
  %v1955 = vshrl.u32 %v1954, 7
  %v1956 = vsub.s32 4, %v1955
  %v1957 = vrot.slane %v1214, %v1956
  %v1958 = vlaneseq
  %v1959 = vshrl.u32 %v1958, 7
  %v1960 = vsub.s32 4, %v1959
  %v1961 = vrot.slane %v1215, %v1960
  %v1962 = vlaneseq
  %v1963 = vshrl.u32 %v1962, 7
  %v1964 = vsub.s32 4, %v1963
  %v1965 = vrot.slane %v1216, %v1964
  %v1966 = vlaneseq
  %v1967 = vshrl.u32 %v1966, 7
  %v1968 = vsub.s32 4, %v1967
  %v1969 = vrot.slane %v1217, %v1968
  %v1970 = vlaneseq
  %v1971 = vshrl.u32 %v1970, 7
  %v1972 = vsub.s32 4, %v1971
  %v1973 = vrot.slane %v1218, %v1972
  %v1974 = vlaneseq
  %v1975 = vshrl.u32 %v1974, 7
  %v1976 = vsub.s32 4, %v1975
  %v1977 = vrot.slane %v1219, %v1976
  %v1978 = vlaneseq
  %v1979 = vshrl.u32 %v1978, 7
  %v1980 = vsub.s32 4, %v1979
  %v1981 = vrot.slane %v1220, %v1980
  %v1982 = vlaneseq
  %v1983 = vshrl.u32 %v1982, 7
  %v1984 = vsub.s32 4, %v1983
  %v1985 = vrot.slane %v1221, %v1984
  %v1986 = vlaneseq
  %v1987 = vshrl.u32 %v1986, 7
  %v1988 = vsub.s32 4, %v1987
  %v1989 = vrot.slane %v1222, %v1988
  %v1990 = vlaneseq
  %v1991 = vshrl.u32 %v1990, 7
  %v1992 = vsub.s32 4, %v1991
  %v1993 = vrot.slane %v1223, %v1992
  %v1994 = vlaneseq
  %v1995 = vshrl.u32 %v1994, 7
  %v1996 = vsub.s32 4, %v1995
  %v1997 = vrot.slane %v1224, %v1996
  %v1998 = vlaneseq
  %v1999 = vshrl.u32 %v1998, 7
  %v2000 = vsub.s32 4, %v1999
  %v2001 = vrot.slane %v1225, %v2000
  %v2002 = vlaneseq
  %v2003 = vshrl.u32 %v2002, 7
  %v2004 = vsub.s32 4, %v2003
  %v2005 = vrot.slane %v1226, %v2004
  %v2006 = vlaneseq
  %v2007 = vshrl.u32 %v2006, 7
  %v2008 = vsub.s32 4, %v2007
  %v2009 = vrot.slane %v1227, %v2008
  %v2010 = vlaneseq
  %v2011 = vshrl.u32 %v2010, 7
  %v2012 = vsub.s32 4, %v2011
  %v2013 = vrot.slane %v1228, %v2012
  %v2014 = vmul.f32 %v1888, %v1953
  %v2015 = vmul.f32 %v1892, %v1957
  %v2016 = vmul.f32 %v1896, %v1961
  %v2017 = vmul.f32 %v1900, %v1965
  %v2018 = vmul.f32 %v1904, %v1969
  %v2019 = vmul.f32 %v1908, %v1973
  %v2020 = vmul.f32 %v1912, %v1977
  %v2021 = vmul.f32 %v1916, %v1981
  %v2022 = vmul.f32 %v1920, %v1985
  %v2023 = vmul.f32 %v1924, %v1989
  %v2024 = vmul.f32 %v1928, %v1993
  %v2025 = vmul.f32 %v1932, %v1997
  %v2026 = vmul.f32 %v1936, %v2001
  %v2027 = vmul.f32 %v1940, %v2005
  %v2028 = vmul.f32 %v1944, %v2009
  %v2029 = vmul.f32 %v1948, %v2013
  %v2030 = vadd.f32 %v1870, %v2014
  %v2031 = vadd.f32 %v1871, %v2015
  %v2032 = vadd.f32 %v1872, %v2016
  %v2033 = vadd.f32 %v1873, %v2017
  %v2034 = vadd.f32 %v1874, %v2018
  %v2035 = vadd.f32 %v1875, %v2019
  %v2036 = vadd.f32 %v1876, %v2020
  %v2037 = vadd.f32 %v1877, %v2021
  %v2038 = vadd.f32 %v1878, %v2022
  %v2039 = vadd.f32 %v1879, %v2023
  %v2040 = vadd.f32 %v1880, %v2024
  %v2041 = vadd.f32 %v1881, %v2025
  %v2042 = vadd.f32 %v1882, %v2026
  %v2043 = vadd.f32 %v1883, %v2027
  %v2044 = vadd.f32 %v1884, %v2028
  %v2045 = vadd.f32 %v1885, %v2029
  %2046 = vset.pattern.permute.xlu0 5
  %2047 = vperm.xlu0 %2046, %v1179
  %v2048 = vpop.permute.xlu0 %2047
  %2050 = vset.pattern.permute.xlu0 5
  %2051 = vperm.xlu0 %2050, %v1180
  %v2052 = vpop.permute.xlu0 %2051
  %2054 = vset.pattern.permute.xlu0 5
  %2055 = vperm.xlu0 %2054, %v1181
  %v2056 = vpop.permute.xlu0 %2055
  %2058 = vset.pattern.permute.xlu0 5
  %2059 = vperm.xlu0 %2058, %v1182
  %v2060 = vpop.permute.xlu0 %2059
  %2062 = vset.pattern.permute.xlu0 5
  %2063 = vperm.xlu0 %2062, %v1183
  %v2064 = vpop.permute.xlu0 %2063
  %2066 = vset.pattern.permute.xlu0 5
  %2067 = vperm.xlu0 %2066, %v1184
  %v2068 = vpop.permute.xlu0 %2067
  %2070 = vset.pattern.permute.xlu0 5
  %2071 = vperm.xlu0 %2070, %v1185
  %v2072 = vpop.permute.xlu0 %2071
  %2074 = vset.pattern.permute.xlu0 5
  %2075 = vperm.xlu0 %2074, %v1186
  %v2076 = vpop.permute.xlu0 %2075
  %2078 = vset.pattern.permute.xlu0 5
  %2079 = vperm.xlu0 %2078, %v1187
  %v2080 = vpop.permute.xlu0 %2079
  %2082 = vset.pattern.permute.xlu0 5
  %2083 = vperm.xlu0 %2082, %v1188
  %v2084 = vpop.permute.xlu0 %2083
  %2086 = vset.pattern.permute.xlu0 5
  %2087 = vperm.xlu0 %2086, %v1189
  %v2088 = vpop.permute.xlu0 %2087
  %2090 = vset.pattern.permute.xlu0 5
  %2091 = vperm.xlu0 %2090, %v1190
  %v2092 = vpop.permute.xlu0 %2091
  %2094 = vset.pattern.permute.xlu0 5
  %2095 = vperm.xlu0 %2094, %v1191
  %v2096 = vpop.permute.xlu0 %2095
  %2098 = vset.pattern.permute.xlu0 5
  %2099 = vperm.xlu0 %2098, %v1192
  %v2100 = vpop.permute.xlu0 %2099
  %2102 = vset.pattern.permute.xlu0 5
  %2103 = vperm.xlu0 %2102, %v1193
  %v2104 = vpop.permute.xlu0 %2103
  %2106 = vset.pattern.permute.xlu0 5
  %2107 = vperm.xlu0 %2106, %v1194
  %v2108 = vpop.permute.xlu0 %2107
  %v2110 = vlaneseq
  %v2111 = vshrl.u32 %v2110, 7
  %v2112 = vsub.s32 5, %v2111
  %v2113 = vrot.slane %v1213, %v2112
  %v2114 = vlaneseq
  %v2115 = vshrl.u32 %v2114, 7
  %v2116 = vsub.s32 5, %v2115
  %v2117 = vrot.slane %v1214, %v2116
  %v2118 = vlaneseq
  %v2119 = vshrl.u32 %v2118, 7
  %v2120 = vsub.s32 5, %v2119
  %v2121 = vrot.slane %v1215, %v2120
  %v2122 = vlaneseq
  %v2123 = vshrl.u32 %v2122, 7
  %v2124 = vsub.s32 5, %v2123
  %v2125 = vrot.slane %v1216, %v2124
  %v2126 = vlaneseq
  %v2127 = vshrl.u32 %v2126, 7
  %v2128 = vsub.s32 5, %v2127
  %v2129 = vrot.slane %v1217, %v2128
  %v2130 = vlaneseq
  %v2131 = vshrl.u32 %v2130, 7
  %v2132 = vsub.s32 5, %v2131
  %v2133 = vrot.slane %v1218, %v2132
  %v2134 = vlaneseq
  %v2135 = vshrl.u32 %v2134, 7
  %v2136 = vsub.s32 5, %v2135
  %v2137 = vrot.slane %v1219, %v2136
  %v2138 = vlaneseq
  %v2139 = vshrl.u32 %v2138, 7
  %v2140 = vsub.s32 5, %v2139
  %v2141 = vrot.slane %v1220, %v2140
  %v2142 = vlaneseq
  %v2143 = vshrl.u32 %v2142, 7
  %v2144 = vsub.s32 5, %v2143
  %v2145 = vrot.slane %v1221, %v2144
  %v2146 = vlaneseq
  %v2147 = vshrl.u32 %v2146, 7
  %v2148 = vsub.s32 5, %v2147
  %v2149 = vrot.slane %v1222, %v2148
  %v2150 = vlaneseq
  %v2151 = vshrl.u32 %v2150, 7
  %v2152 = vsub.s32 5, %v2151
  %v2153 = vrot.slane %v1223, %v2152
  %v2154 = vlaneseq
  %v2155 = vshrl.u32 %v2154, 7
  %v2156 = vsub.s32 5, %v2155
  %v2157 = vrot.slane %v1224, %v2156
  %v2158 = vlaneseq
  %v2159 = vshrl.u32 %v2158, 7
  %v2160 = vsub.s32 5, %v2159
  %v2161 = vrot.slane %v1225, %v2160
  %v2162 = vlaneseq
  %v2163 = vshrl.u32 %v2162, 7
  %v2164 = vsub.s32 5, %v2163
  %v2165 = vrot.slane %v1226, %v2164
  %v2166 = vlaneseq
  %v2167 = vshrl.u32 %v2166, 7
  %v2168 = vsub.s32 5, %v2167
  %v2169 = vrot.slane %v1227, %v2168
  %v2170 = vlaneseq
  %v2171 = vshrl.u32 %v2170, 7
  %v2172 = vsub.s32 5, %v2171
  %v2173 = vrot.slane %v1228, %v2172
  %v2174 = vmul.f32 %v2048, %v2113
  %v2175 = vmul.f32 %v2052, %v2117
  %v2176 = vmul.f32 %v2056, %v2121
  %v2177 = vmul.f32 %v2060, %v2125
  %v2178 = vmul.f32 %v2064, %v2129
  %v2179 = vmul.f32 %v2068, %v2133
  %v2180 = vmul.f32 %v2072, %v2137
  %v2181 = vmul.f32 %v2076, %v2141
  %v2182 = vmul.f32 %v2080, %v2145
  %v2183 = vmul.f32 %v2084, %v2149
  %v2184 = vmul.f32 %v2088, %v2153
  %v2185 = vmul.f32 %v2092, %v2157
  %v2186 = vmul.f32 %v2096, %v2161
  %v2187 = vmul.f32 %v2100, %v2165
  %v2188 = vmul.f32 %v2104, %v2169
  %v2189 = vmul.f32 %v2108, %v2173
  %v2190 = vadd.f32 %v2030, %v2174
  %v2191 = vadd.f32 %v2031, %v2175
  %v2192 = vadd.f32 %v2032, %v2176
  %v2193 = vadd.f32 %v2033, %v2177
  %v2194 = vadd.f32 %v2034, %v2178
  %v2195 = vadd.f32 %v2035, %v2179
  %v2196 = vadd.f32 %v2036, %v2180
  %v2197 = vadd.f32 %v2037, %v2181
  %v2198 = vadd.f32 %v2038, %v2182
  %v2199 = vadd.f32 %v2039, %v2183
  %v2200 = vadd.f32 %v2040, %v2184
  %v2201 = vadd.f32 %v2041, %v2185
  %v2202 = vadd.f32 %v2042, %v2186
  %v2203 = vadd.f32 %v2043, %v2187
  %v2204 = vadd.f32 %v2044, %v2188
  %v2205 = vadd.f32 %v2045, %v2189
  %2206 = vset.pattern.permute.xlu0 6
  %2207 = vperm.xlu0 %2206, %v1179
  %v2208 = vpop.permute.xlu0 %2207
  %2210 = vset.pattern.permute.xlu0 6
  %2211 = vperm.xlu0 %2210, %v1180
  %v2212 = vpop.permute.xlu0 %2211
  %2214 = vset.pattern.permute.xlu0 6
  %2215 = vperm.xlu0 %2214, %v1181
  %v2216 = vpop.permute.xlu0 %2215
  %2218 = vset.pattern.permute.xlu0 6
  %2219 = vperm.xlu0 %2218, %v1182
  %v2220 = vpop.permute.xlu0 %2219
  %2222 = vset.pattern.permute.xlu0 6
  %2223 = vperm.xlu0 %2222, %v1183
  %v2224 = vpop.permute.xlu0 %2223
  %2226 = vset.pattern.permute.xlu0 6
  %2227 = vperm.xlu0 %2226, %v1184
  %v2228 = vpop.permute.xlu0 %2227
  %2230 = vset.pattern.permute.xlu0 6
  %2231 = vperm.xlu0 %2230, %v1185
  %v2232 = vpop.permute.xlu0 %2231
  %2234 = vset.pattern.permute.xlu0 6
  %2235 = vperm.xlu0 %2234, %v1186
  %v2236 = vpop.permute.xlu0 %2235
  %2238 = vset.pattern.permute.xlu0 6
  %2239 = vperm.xlu0 %2238, %v1187
  %v2240 = vpop.permute.xlu0 %2239
  %2242 = vset.pattern.permute.xlu0 6
  %2243 = vperm.xlu0 %2242, %v1188
  %v2244 = vpop.permute.xlu0 %2243
  %2246 = vset.pattern.permute.xlu0 6
  %2247 = vperm.xlu0 %2246, %v1189
  %v2248 = vpop.permute.xlu0 %2247
  %2250 = vset.pattern.permute.xlu0 6
  %2251 = vperm.xlu0 %2250, %v1190
  %v2252 = vpop.permute.xlu0 %2251
  %2254 = vset.pattern.permute.xlu0 6
  %2255 = vperm.xlu0 %2254, %v1191
  %v2256 = vpop.permute.xlu0 %2255
  %2258 = vset.pattern.permute.xlu0 6
  %2259 = vperm.xlu0 %2258, %v1192
  %v2260 = vpop.permute.xlu0 %2259
  %2262 = vset.pattern.permute.xlu0 6
  %2263 = vperm.xlu0 %2262, %v1193
  %v2264 = vpop.permute.xlu0 %2263
  %2266 = vset.pattern.permute.xlu0 6
  %2267 = vperm.xlu0 %2266, %v1194
  %v2268 = vpop.permute.xlu0 %2267
  %v2270 = vlaneseq
  %v2271 = vshrl.u32 %v2270, 7
  %v2272 = vsub.s32 6, %v2271
  %v2273 = vrot.slane %v1213, %v2272
  %v2274 = vlaneseq
  %v2275 = vshrl.u32 %v2274, 7
  %v2276 = vsub.s32 6, %v2275
  %v2277 = vrot.slane %v1214, %v2276
  %v2278 = vlaneseq
  %v2279 = vshrl.u32 %v2278, 7
  %v2280 = vsub.s32 6, %v2279
  %v2281 = vrot.slane %v1215, %v2280
  %v2282 = vlaneseq
  %v2283 = vshrl.u32 %v2282, 7
  %v2284 = vsub.s32 6, %v2283
  %v2285 = vrot.slane %v1216, %v2284
  %v2286 = vlaneseq
  %v2287 = vshrl.u32 %v2286, 7
  %v2288 = vsub.s32 6, %v2287
  %v2289 = vrot.slane %v1217, %v2288
  %v2290 = vlaneseq
  %v2291 = vshrl.u32 %v2290, 7
  %v2292 = vsub.s32 6, %v2291
  %v2293 = vrot.slane %v1218, %v2292
  %v2294 = vlaneseq
  %v2295 = vshrl.u32 %v2294, 7
  %v2296 = vsub.s32 6, %v2295
  %v2297 = vrot.slane %v1219, %v2296
  %v2298 = vlaneseq
  %v2299 = vshrl.u32 %v2298, 7
  %v2300 = vsub.s32 6, %v2299
  %v2301 = vrot.slane %v1220, %v2300
  %v2302 = vlaneseq
  %v2303 = vshrl.u32 %v2302, 7
  %v2304 = vsub.s32 6, %v2303
  %v2305 = vrot.slane %v1221, %v2304
  %v2306 = vlaneseq
  %v2307 = vshrl.u32 %v2306, 7
  %v2308 = vsub.s32 6, %v2307
  %v2309 = vrot.slane %v1222, %v2308
  %v2310 = vlaneseq
  %v2311 = vshrl.u32 %v2310, 7
  %v2312 = vsub.s32 6, %v2311
  %v2313 = vrot.slane %v1223, %v2312
  %v2314 = vlaneseq
  %v2315 = vshrl.u32 %v2314, 7
  %v2316 = vsub.s32 6, %v2315
  %v2317 = vrot.slane %v1224, %v2316
  %v2318 = vlaneseq
  %v2319 = vshrl.u32 %v2318, 7
  %v2320 = vsub.s32 6, %v2319
  %v2321 = vrot.slane %v1225, %v2320
  %v2322 = vlaneseq
  %v2323 = vshrl.u32 %v2322, 7
  %v2324 = vsub.s32 6, %v2323
  %v2325 = vrot.slane %v1226, %v2324
  %v2326 = vlaneseq
  %v2327 = vshrl.u32 %v2326, 7
  %v2328 = vsub.s32 6, %v2327
  %v2329 = vrot.slane %v1227, %v2328
  %v2330 = vlaneseq
  %v2331 = vshrl.u32 %v2330, 7
  %v2332 = vsub.s32 6, %v2331
  %v2333 = vrot.slane %v1228, %v2332
  %v2334 = vmul.f32 %v2208, %v2273
  %v2335 = vmul.f32 %v2212, %v2277
  %v2336 = vmul.f32 %v2216, %v2281
  %v2337 = vmul.f32 %v2220, %v2285
  %v2338 = vmul.f32 %v2224, %v2289
  %v2339 = vmul.f32 %v2228, %v2293
  %v2340 = vmul.f32 %v2232, %v2297
  %v2341 = vmul.f32 %v2236, %v2301
  %v2342 = vmul.f32 %v2240, %v2305
  %v2343 = vmul.f32 %v2244, %v2309
  %v2344 = vmul.f32 %v2248, %v2313
  %v2345 = vmul.f32 %v2252, %v2317
  %v2346 = vmul.f32 %v2256, %v2321
  %v2347 = vmul.f32 %v2260, %v2325
  %v2348 = vmul.f32 %v2264, %v2329
  %v2349 = vmul.f32 %v2268, %v2333
  %v2350 = vadd.f32 %v2190, %v2334
  %v2351 = vadd.f32 %v2191, %v2335
  %v2352 = vadd.f32 %v2192, %v2336
  %v2353 = vadd.f32 %v2193, %v2337
  %v2354 = vadd.f32 %v2194, %v2338
  %v2355 = vadd.f32 %v2195, %v2339
  %v2356 = vadd.f32 %v2196, %v2340
  %v2357 = vadd.f32 %v2197, %v2341
  %v2358 = vadd.f32 %v2198, %v2342
  %v2359 = vadd.f32 %v2199, %v2343
  %v2360 = vadd.f32 %v2200, %v2344
  %v2361 = vadd.f32 %v2201, %v2345
  %v2362 = vadd.f32 %v2202, %v2346
  %v2363 = vadd.f32 %v2203, %v2347
  %v2364 = vadd.f32 %v2204, %v2348
  %v2365 = vadd.f32 %v2205, %v2349
  %2366 = vset.pattern.permute.xlu0 7
  %2367 = vperm.xlu0 %2366, %v1179
  %v2368 = vpop.permute.xlu0 %2367
  %2370 = vset.pattern.permute.xlu0 7
  %2371 = vperm.xlu0 %2370, %v1180
  %v2372 = vpop.permute.xlu0 %2371
  %2374 = vset.pattern.permute.xlu0 7
  %2375 = vperm.xlu0 %2374, %v1181
  %v2376 = vpop.permute.xlu0 %2375
  %2378 = vset.pattern.permute.xlu0 7
  %2379 = vperm.xlu0 %2378, %v1182
  %v2380 = vpop.permute.xlu0 %2379
  %2382 = vset.pattern.permute.xlu0 7
  %2383 = vperm.xlu0 %2382, %v1183
  %v2384 = vpop.permute.xlu0 %2383
  %2386 = vset.pattern.permute.xlu0 7
  %2387 = vperm.xlu0 %2386, %v1184
  %v2388 = vpop.permute.xlu0 %2387
  %2390 = vset.pattern.permute.xlu0 7
  %2391 = vperm.xlu0 %2390, %v1185
  %v2392 = vpop.permute.xlu0 %2391
  %2394 = vset.pattern.permute.xlu0 7
  %2395 = vperm.xlu0 %2394, %v1186
  %v2396 = vpop.permute.xlu0 %2395
  %2398 = vset.pattern.permute.xlu0 7
  %2399 = vperm.xlu0 %2398, %v1187
  %v2400 = vpop.permute.xlu0 %2399
  %2402 = vset.pattern.permute.xlu0 7
  %2403 = vperm.xlu0 %2402, %v1188
  %v2404 = vpop.permute.xlu0 %2403
  %2406 = vset.pattern.permute.xlu0 7
  %2407 = vperm.xlu0 %2406, %v1189
  %v2408 = vpop.permute.xlu0 %2407
  %2410 = vset.pattern.permute.xlu0 7
  %2411 = vperm.xlu0 %2410, %v1190
  %v2412 = vpop.permute.xlu0 %2411
  %2414 = vset.pattern.permute.xlu0 7
  %2415 = vperm.xlu0 %2414, %v1191
  %v2416 = vpop.permute.xlu0 %2415
  %2418 = vset.pattern.permute.xlu0 7
  %2419 = vperm.xlu0 %2418, %v1192
  %v2420 = vpop.permute.xlu0 %2419
  %2422 = vset.pattern.permute.xlu0 7
  %2423 = vperm.xlu0 %2422, %v1193
  %v2424 = vpop.permute.xlu0 %2423
  %2426 = vset.pattern.permute.xlu0 7
  %2427 = vperm.xlu0 %2426, %v1194
  %v2428 = vpop.permute.xlu0 %2427
  %v2430 = vlaneseq
  %v2431 = vshrl.u32 %v2430, 7
  %v2432 = vsub.s32 7, %v2431
  %v2433 = vrot.slane %v1213, %v2432
  %v2434 = vlaneseq
  %v2435 = vshrl.u32 %v2434, 7
  %v2436 = vsub.s32 7, %v2435
  %v2437 = vrot.slane %v1214, %v2436
  %v2438 = vlaneseq
  %v2439 = vshrl.u32 %v2438, 7
  %v2440 = vsub.s32 7, %v2439
  %v2441 = vrot.slane %v1215, %v2440
  %v2442 = vlaneseq
  %v2443 = vshrl.u32 %v2442, 7
  %v2444 = vsub.s32 7, %v2443
  %v2445 = vrot.slane %v1216, %v2444
  %v2446 = vlaneseq
  %v2447 = vshrl.u32 %v2446, 7
  %v2448 = vsub.s32 7, %v2447
  %v2449 = vrot.slane %v1217, %v2448
  %v2450 = vlaneseq
  %v2451 = vshrl.u32 %v2450, 7
  %v2452 = vsub.s32 7, %v2451
  %v2453 = vrot.slane %v1218, %v2452
  %v2454 = vlaneseq
  %v2455 = vshrl.u32 %v2454, 7
  %v2456 = vsub.s32 7, %v2455
  %v2457 = vrot.slane %v1219, %v2456
  %v2458 = vlaneseq
  %v2459 = vshrl.u32 %v2458, 7
  %v2460 = vsub.s32 7, %v2459
  %v2461 = vrot.slane %v1220, %v2460
  %v2462 = vlaneseq
  %v2463 = vshrl.u32 %v2462, 7
  %v2464 = vsub.s32 7, %v2463
  %v2465 = vrot.slane %v1221, %v2464
  %v2466 = vlaneseq
  %v2467 = vshrl.u32 %v2466, 7
  %v2468 = vsub.s32 7, %v2467
  %v2469 = vrot.slane %v1222, %v2468
  %v2470 = vlaneseq
  %v2471 = vshrl.u32 %v2470, 7
  %v2472 = vsub.s32 7, %v2471
  %v2473 = vrot.slane %v1223, %v2472
  %v2474 = vlaneseq
  %v2475 = vshrl.u32 %v2474, 7
  %v2476 = vsub.s32 7, %v2475
  %v2477 = vrot.slane %v1224, %v2476
  %v2478 = vlaneseq
  %v2479 = vshrl.u32 %v2478, 7
  %v2480 = vsub.s32 7, %v2479
  %v2481 = vrot.slane %v1225, %v2480
  %v2482 = vlaneseq
  %v2483 = vshrl.u32 %v2482, 7
  %v2484 = vsub.s32 7, %v2483
  %v2485 = vrot.slane %v1226, %v2484
  %v2486 = vlaneseq
  %v2487 = vshrl.u32 %v2486, 7
  %v2488 = vsub.s32 7, %v2487
  %v2489 = vrot.slane %v1227, %v2488
  %v2490 = vlaneseq
  %v2491 = vshrl.u32 %v2490, 7
  %v2492 = vsub.s32 7, %v2491
  %v2493 = vrot.slane %v1228, %v2492
  %v2494 = vmul.f32 %v2368, %v2433
  %v2495 = vmul.f32 %v2372, %v2437
  %v2496 = vmul.f32 %v2376, %v2441
  %v2497 = vmul.f32 %v2380, %v2445
  %v2498 = vmul.f32 %v2384, %v2449
  %v2499 = vmul.f32 %v2388, %v2453
  %v2500 = vmul.f32 %v2392, %v2457
  %v2501 = vmul.f32 %v2396, %v2461
  %v2502 = vmul.f32 %v2400, %v2465
  %v2503 = vmul.f32 %v2404, %v2469
  %v2504 = vmul.f32 %v2408, %v2473
  %v2505 = vmul.f32 %v2412, %v2477
  %v2506 = vmul.f32 %v2416, %v2481
  %v2507 = vmul.f32 %v2420, %v2485
  %v2508 = vmul.f32 %v2424, %v2489
  %v2509 = vmul.f32 %v2428, %v2493
  %v2510 = vadd.f32 %v2350, %v2494
  %v2511 = vadd.f32 %v2351, %v2495
  %v2512 = vadd.f32 %v2352, %v2496
  %v2513 = vadd.f32 %v2353, %v2497
  %v2514 = vadd.f32 %v2354, %v2498
  %v2515 = vadd.f32 %v2355, %v2499
  %v2516 = vadd.f32 %v2356, %v2500
  %v2517 = vadd.f32 %v2357, %v2501
  %v2518 = vadd.f32 %v2358, %v2502
  %v2519 = vadd.f32 %v2359, %v2503
  %v2520 = vadd.f32 %v2360, %v2504
  %v2521 = vadd.f32 %v2361, %v2505
  %v2522 = vadd.f32 %v2362, %v2506
  %v2523 = vadd.f32 %v2363, %v2507
  %v2524 = vadd.f32 %v2364, %v2508
  %v2525 = vadd.f32 %v2365, %v2509
  %v2526 = vcombine.low %v2510, %v2512
  %v2527 = vcombine.high %v2510, %v2512
  %v2529 = vunpack.c.l.s4 1983009808
  %v2530 = vunpack.c.0.s8 %v2529
  %v2531 = vlaneseq
  %v2532 = vshrl.u32 %v2531, 7
  %v2533 = vsub.s32 %v2530, %v2532
  %v2534 = vrot.slane %v2526, %v2533
  %v2536 = vunpack.c.l.s4 1983009808
  %v2537 = vunpack.c.0.s8 %v2536
  %v2538 = vlaneseq
  %v2539 = vshrl.u32 %v2538, 7
  %v2540 = vsub.s32 %v2537, %v2539
  %v2541 = vrot.slane %v2527, %v2540
  %v2542 = vcombine.low %v2511, %v2513
  %v2543 = vcombine.high %v2511, %v2513
  %v2545 = vunpack.c.l.s4 1983009808
  %v2546 = vunpack.c.0.s8 %v2545
  %v2547 = vlaneseq
  %v2548 = vshrl.u32 %v2547, 7
  %v2549 = vsub.s32 %v2546, %v2548
  %v2550 = vrot.slane %v2542, %v2549
  %v2552 = vunpack.c.l.s4 1983009808
  %v2553 = vunpack.c.0.s8 %v2552
  %v2554 = vlaneseq
  %v2555 = vshrl.u32 %v2554, 7
  %v2556 = vsub.s32 %v2553, %v2555
  %v2557 = vrot.slane %v2543, %v2556
  %v2558 = vcombine.low %v2514, %v2516
  %v2559 = vcombine.high %v2514, %v2516
  %v2561 = vunpack.c.l.s4 1983009808
  %v2562 = vunpack.c.0.s8 %v2561
  %v2563 = vlaneseq
  %v2564 = vshrl.u32 %v2563, 7
  %v2565 = vsub.s32 %v2562, %v2564
  %v2566 = vrot.slane %v2558, %v2565
  %v2568 = vunpack.c.l.s4 1983009808
  %v2569 = vunpack.c.0.s8 %v2568
  %v2570 = vlaneseq
  %v2571 = vshrl.u32 %v2570, 7
  %v2572 = vsub.s32 %v2569, %v2571
  %v2573 = vrot.slane %v2559, %v2572
  %v2574 = vcombine.low %v2515, %v2517
  %v2575 = vcombine.high %v2515, %v2517
  %v2577 = vunpack.c.l.s4 1983009808
  %v2578 = vunpack.c.0.s8 %v2577
  %v2579 = vlaneseq
  %v2580 = vshrl.u32 %v2579, 7
  %v2581 = vsub.s32 %v2578, %v2580
  %v2582 = vrot.slane %v2574, %v2581
  %v2584 = vunpack.c.l.s4 1983009808
  %v2585 = vunpack.c.0.s8 %v2584
  %v2586 = vlaneseq
  %v2587 = vshrl.u32 %v2586, 7
  %v2588 = vsub.s32 %v2585, %v2587
  %v2589 = vrot.slane %v2575, %v2588
  %v2590 = vcombine.low %v2534, %v2550
  %v2591 = vcombine.high %v2534, %v2550
  %v2593 = vunpack.c.l.s4 1934713408
  %v2594 = vunpack.c.0.s8 %v2593
  %v2595 = vlaneseq
  %v2596 = vshrl.u32 %v2595, 7
  %v2597 = vsub.s32 %v2594, %v2596
  %v2598 = vrot.slane %v2590, %v2597
  %v2600 = vunpack.c.l.s4 1934713408
  %v2601 = vunpack.c.0.s8 %v2600
  %v2602 = vlaneseq
  %v2603 = vshrl.u32 %v2602, 7
  %v2604 = vsub.s32 %v2601, %v2603
  %v2605 = vrot.slane %v2591, %v2604
  %v2606 = vcombine.low %v2541, %v2557
  %v2607 = vcombine.high %v2541, %v2557
  %v2609 = vunpack.c.l.s4 1934713408
  %v2610 = vunpack.c.0.s8 %v2609
  %v2611 = vlaneseq
  %v2612 = vshrl.u32 %v2611, 7
  %v2613 = vsub.s32 %v2610, %v2612
  %v2614 = vrot.slane %v2606, %v2613
  %v2616 = vunpack.c.l.s4 1934713408
  %v2617 = vunpack.c.0.s8 %v2616
  %v2618 = vlaneseq
  %v2619 = vshrl.u32 %v2618, 7
  %v2620 = vsub.s32 %v2617, %v2619
  %v2621 = vrot.slane %v2607, %v2620
  %v2622 = vcombine.low %v2566, %v2582
  %v2623 = vcombine.high %v2566, %v2582
  %v2625 = vunpack.c.l.s4 1934713408
  %v2626 = vunpack.c.0.s8 %v2625
  %v2627 = vlaneseq
  %v2628 = vshrl.u32 %v2627, 7
  %v2629 = vsub.s32 %v2626, %v2628
  %v2630 = vrot.slane %v2622, %v2629
  %v2632 = vunpack.c.l.s4 1934713408
  %v2633 = vunpack.c.0.s8 %v2632
  %v2634 = vlaneseq
  %v2635 = vshrl.u32 %v2634, 7
  %v2636 = vsub.s32 %v2633, %v2635
  %v2637 = vrot.slane %v2623, %v2636
  %v2638 = vcombine.low %v2573, %v2589
  %v2639 = vcombine.high %v2573, %v2589
  %v2641 = vunpack.c.l.s4 1934713408
  %v2642 = vunpack.c.0.s8 %v2641
  %v2643 = vlaneseq
  %v2644 = vshrl.u32 %v2643, 7
  %v2645 = vsub.s32 %v2642, %v2644
  %v2646 = vrot.slane %v2638, %v2645
  %v2648 = vunpack.c.l.s4 1934713408
  %v2649 = vunpack.c.0.s8 %v2648
  %v2650 = vlaneseq
  %v2651 = vshrl.u32 %v2650, 7
  %v2652 = vsub.s32 %v2649, %v2651
  %v2653 = vrot.slane %v2639, %v2652
  %v2654 = vcombine.low %v2598, %v2630
  %v2655 = vcombine.high %v2598, %v2630
  %v2656 = vcombine.low %v2605, %v2637
  %v2657 = vcombine.high %v2605, %v2637
  %v2658 = vcombine.low %v2614, %v2646
  %v2659 = vcombine.high %v2614, %v2646
  %v2660 = vcombine.low %v2621, %v2653
  %v2661 = vcombine.high %v2621, %v2653
  %v2662 = vcombine.low %v2518, %v2520
  %v2663 = vcombine.high %v2518, %v2520
  %v2665 = vunpack.c.l.s4 1983009808
  %v2666 = vunpack.c.0.s8 %v2665
  %v2667 = vlaneseq
  %v2668 = vshrl.u32 %v2667, 7
  %v2669 = vsub.s32 %v2666, %v2668
  %v2670 = vrot.slane %v2662, %v2669
  %v2672 = vunpack.c.l.s4 1983009808
  %v2673 = vunpack.c.0.s8 %v2672
  %v2674 = vlaneseq
  %v2675 = vshrl.u32 %v2674, 7
  %v2676 = vsub.s32 %v2673, %v2675
  %v2677 = vrot.slane %v2663, %v2676
  %v2678 = vcombine.low %v2519, %v2521
  %v2679 = vcombine.high %v2519, %v2521
  %v2681 = vunpack.c.l.s4 1983009808
  %v2682 = vunpack.c.0.s8 %v2681
  %v2683 = vlaneseq
  %v2684 = vshrl.u32 %v2683, 7
  %v2685 = vsub.s32 %v2682, %v2684
  %v2686 = vrot.slane %v2678, %v2685
  %v2688 = vunpack.c.l.s4 1983009808
  %v2689 = vunpack.c.0.s8 %v2688
  %v2690 = vlaneseq
  %v2691 = vshrl.u32 %v2690, 7
  %v2692 = vsub.s32 %v2689, %v2691
  %v2693 = vrot.slane %v2679, %v2692
  %v2694 = vcombine.low %v2522, %v2524
  %v2695 = vcombine.high %v2522, %v2524
  %v2697 = vunpack.c.l.s4 1983009808
  %v2698 = vunpack.c.0.s8 %v2697
  %v2699 = vlaneseq
  %v2700 = vshrl.u32 %v2699, 7
  %v2701 = vsub.s32 %v2698, %v2700
  %v2702 = vrot.slane %v2694, %v2701
  %v2704 = vunpack.c.l.s4 1983009808
  %v2705 = vunpack.c.0.s8 %v2704
  %v2706 = vlaneseq
  %v2707 = vshrl.u32 %v2706, 7
  %v2708 = vsub.s32 %v2705, %v2707
  %v2709 = vrot.slane %v2695, %v2708
  %v2710 = vcombine.low %v2523, %v2525
  %v2711 = vcombine.high %v2523, %v2525
  %v2713 = vunpack.c.l.s4 1983009808
  %v2714 = vunpack.c.0.s8 %v2713
  %v2715 = vlaneseq
  %v2716 = vshrl.u32 %v2715, 7
  %v2717 = vsub.s32 %v2714, %v2716
  %v2718 = vrot.slane %v2710, %v2717
  %v2720 = vunpack.c.l.s4 1983009808
  %v2721 = vunpack.c.0.s8 %v2720
  %v2722 = vlaneseq
  %v2723 = vshrl.u32 %v2722, 7
  %v2724 = vsub.s32 %v2721, %v2723
  %v2725 = vrot.slane %v2711, %v2724
  %v2726 = vcombine.low %v2670, %v2686
  %v2727 = vcombine.high %v2670, %v2686
  %v2729 = vunpack.c.l.s4 1934713408
  %v2730 = vunpack.c.0.s8 %v2729
  %v2731 = vlaneseq
  %v2732 = vshrl.u32 %v2731, 7
  %v2733 = vsub.s32 %v2730, %v2732
  %v2734 = vrot.slane %v2726, %v2733
  %v2736 = vunpack.c.l.s4 1934713408
  %v2737 = vunpack.c.0.s8 %v2736
  %v2738 = vlaneseq
  %v2739 = vshrl.u32 %v2738, 7
  %v2740 = vsub.s32 %v2737, %v2739
  %v2741 = vrot.slane %v2727, %v2740
  %v2742 = vcombine.low %v2677, %v2693
  %v2743 = vcombine.high %v2677, %v2693
  %v2745 = vunpack.c.l.s4 1934713408
  %v2746 = vunpack.c.0.s8 %v2745
  %v2747 = vlaneseq
  %v2748 = vshrl.u32 %v2747, 7
  %v2749 = vsub.s32 %v2746, %v2748
  %v2750 = vrot.slane %v2742, %v2749
  %v2752 = vunpack.c.l.s4 1934713408
  %v2753 = vunpack.c.0.s8 %v2752
  %v2754 = vlaneseq
  %v2755 = vshrl.u32 %v2754, 7
  %v2756 = vsub.s32 %v2753, %v2755
  %v2757 = vrot.slane %v2743, %v2756
  %v2758 = vcombine.low %v2702, %v2718
  %v2759 = vcombine.high %v2702, %v2718
  %v2761 = vunpack.c.l.s4 1934713408
  %v2762 = vunpack.c.0.s8 %v2761
  %v2763 = vlaneseq
  %v2764 = vshrl.u32 %v2763, 7
  %v2765 = vsub.s32 %v2762, %v2764
  %v2766 = vrot.slane %v2758, %v2765
  %v2768 = vunpack.c.l.s4 1934713408
  %v2769 = vunpack.c.0.s8 %v2768
  %v2770 = vlaneseq
  %v2771 = vshrl.u32 %v2770, 7
  %v2772 = vsub.s32 %v2769, %v2771
  %v2773 = vrot.slane %v2759, %v2772
  %v2774 = vcombine.low %v2709, %v2725
  %v2775 = vcombine.high %v2709, %v2725
  %v2777 = vunpack.c.l.s4 1934713408
  %v2778 = vunpack.c.0.s8 %v2777
  %v2779 = vlaneseq
  %v2780 = vshrl.u32 %v2779, 7
  %v2781 = vsub.s32 %v2778, %v2780
  %v2782 = vrot.slane %v2774, %v2781
  %v2784 = vunpack.c.l.s4 1934713408
  %v2785 = vunpack.c.0.s8 %v2784
  %v2786 = vlaneseq
  %v2787 = vshrl.u32 %v2786, 7
  %v2788 = vsub.s32 %v2785, %v2787
  %v2789 = vrot.slane %v2775, %v2788
  %v2790 = vcombine.low %v2734, %v2766
  %v2791 = vcombine.high %v2734, %v2766
  %v2792 = vcombine.low %v2741, %v2773
  %v2793 = vcombine.high %v2741, %v2773
  %v2794 = vcombine.low %v2750, %v2782
  %v2795 = vcombine.high %v2750, %v2782
  %v2796 = vcombine.low %v2757, %v2789
  %v2797 = vcombine.high %v2757, %v2789
  %2800 = vrot.lane.b32.xlu0 %v2655, 8
  %v2801 = vpop.permute.xlu0 %2800
  %2802 = vrot.lane.b32.xlu0 %v2791, 8
  %v2803 = vpop.permute.xlu0 %2802
  %2808 = vrot.lane.b32.xlu0 %v2656, 16
  %v2809 = vpop.permute.xlu0 %2808
  %2810 = vrot.lane.b32.xlu0 %v2792, 16
  %v2811 = vpop.permute.xlu0 %2810
  %2816 = vrot.lane.b32.xlu0 %v2657, 24
  %v2817 = vpop.permute.xlu0 %2816
  %2818 = vrot.lane.b32.xlu0 %v2793, 24
  %v2819 = vpop.permute.xlu0 %2818
  %2824 = vrot.lane.b32.xlu0 %v2658, 32
  %v2825 = vpop.permute.xlu0 %2824
  %2826 = vrot.lane.b32.xlu0 %v2794, 32
  %v2827 = vpop.permute.xlu0 %2826
  %2832 = vrot.lane.b32.xlu0 %v2659, 40
  %v2833 = vpop.permute.xlu0 %2832
  %2834 = vrot.lane.b32.xlu0 %v2795, 40
  %v2835 = vpop.permute.xlu0 %2834
  %2840 = vrot.lane.b32.xlu0 %v2660, 48
  %v2841 = vpop.permute.xlu0 %2840
  %2842 = vrot.lane.b32.xlu0 %v2796, 48
  %v2843 = vpop.permute.xlu0 %2842
  %2848 = vrot.lane.b32.xlu0 %v2661, 56
  %v2849 = vpop.permute.xlu0 %2848
  %2850 = vrot.lane.b32.xlu0 %v2797, 56
  %v2851 = vpop.permute.xlu0 %2850
  %vm2854 = vcmask 64512
  %v2855 = vsel %vm2854, %v2654, %v2801
  %v2856 = vsel %vm2854, %v2790, %v2803
  %vm2857 = vcmask 130048
  %v2858 = vsel %vm2857, %v2855, %v2809
  %v2859 = vsel %vm2857, %v2856, %v2811
  %vm2860 = vcmask 195584
  %v2861 = vsel %vm2860, %v2858, %v2817
  %v2862 = vsel %vm2860, %v2859, %v2819
  %v2863 = vsel %vm87, %v2861, %v2825
  %v2864 = vsel %vm87, %v2862, %v2827
  %vm2865 = vcmask 326656
  %v2866 = vsel %vm2865, %v2863, %v2833
  %v2867 = vsel %vm2865, %v2864, %v2835
  %vm2868 = vcmask 392192
  %v2869 = vsel %vm2868, %v2866, %v2841
  %v2870 = vsel %vm2868, %v2867, %v2843
  %vm2871 = vcmask 457728
  %v2872 = vsel %vm2871, %v2869, %v2849
  %v2873 = vsel %vm2871, %v2870, %v2851
  %2876 = vrot.lane.b32.xlu0 %v2872, 8
  %v2877 = vpop.permute.xlu0 %2876
  %2878 = vrot.lane.b32.xlu0 %v2873, 8
  %v2879 = vpop.permute.xlu0 %2878
  %v2882 = vsel %vm2854, %v334, %v2877
  %v2883 = vsel %vm2854, %v340, %v2879
  %vm2884 = vcmask 588800
  %v2885 = vsel %vm2884, %v2882, 0.0
  %v2886 = vsel %vm2884, %v2883, 0.0
  %2887 = vst [vmem:[%s7] sm:$0xff] %v2885
  %2888 = vst [vmem:[%s7 + $0x8] sm:$0xff] %v2886
  // Predicated region
  $region30: #{encoder_forward.1} parent=0 // pred_check
    _
  $region31: #{encoder_forward.1} parent=0 // pred_check_branch
    %2890 = sbr.rel (0) target = $region33
  $region32: #{encoder_forward.1} parent=0 // pred_region
    _
  $region33: #{encoder_forward.1} parent=0 // pred_fallthru
    _
  // Predicated region
  $region34: #{encoder_forward.1} parent=0 // pred_check
    _
  $region35: #{encoder_forward.1} parent=0 // pred_check_branch
    %2892 = sbr.rel (0) target = $region37
  $region36: #{encoder_forward.1} parent=0 // pred_region
    _
  $region37: #{encoder_forward.1} parent=0 // pred_fallthru
    _

</llo_original>
